<compile_context>
chip_gen: v6e
topology: v6e:2x2x1
jax: 0.10.0
libtpu: 0.0.40
codegen_flags: <defaults>
</compile_context>

<pallas_src>
import functools

import jax
import jax.numpy as jnp
from jax.experimental import pallas as pl
from jax.experimental.pallas import tpu as pltpu

EMB = 128          # embedding dim (fixed by the module)
HIDDEN = 64        # nn.Linear(384, 64)
HIDDEN_PAD = 128   # hidden padded to a full lane group (zero cols/rows -> exact)


def _round_up(x, m):
    return (x + m - 1) // m * m


# ----------------------------------------------------------------------------
# Kernel: vectorized one-hot embedding reduce (VPU+MXU) + fused 2-layer MLP
# ----------------------------------------------------------------------------
def _prescription_kernel(
    # per-tile VMEM inputs
    dcodes_ref,  # (TB, Ld) int32, padded slots = sentinel (zero table row)
    pcodes_ref,  # (TB, Lp) int32
    mcodes_ref,  # (TB, Lm) int32
    # VMEM-resident tables / weights (constant index_map)
    ed_ref,      # (vocab_d_pad, 128) f32
    ep_ref,      # (vocab_p_pad, 128) f32
    em_ref,      # (vocab_m_pad, 128) f32
    w1_ref,      # (384, 128) bf16   (hidden zero-padded 64 -> 128)
    b1_ref,      # (1, 128)   f32
    w2_ref,      # (128, OUT) bf16   (med_len zero-padded -> OUT)
    b2_ref,      # (1, OUT)   f32
    # output
    out_ref,     # (TB, OUT)  f32
):
    tb = out_ref.shape[0]

    def embed(codes_ref, table_ref):
        lmax = codes_ref.shape[1]
        vocab_pad = table_ref.shape[0]
        codes = codes_ref[...]                                        # (tb, lmax) int32
        col_ids = jax.lax.broadcasted_iota(jnp.int32, (tb, vocab_pad), 1)
        counts = jnp.zeros((tb, vocab_pad), jnp.float32)
        # lmax is small and static; pure VPU compare+add, no scalar loads.
        for l in range(lmax):
            c = codes[:, l:l + 1]                                     # (tb, 1)
            counts = counts + jnp.where(c == col_ids, 1.0, 0.0)
        # Sentinel / out-of-range codes hit zero rows (or no column) => add 0.
        # Full-precision f32 matmul so the embedding sum matches the reference.
        return jnp.dot(counts, table_ref[...],
                       preferred_element_type=jnp.float32,
                       precision=jax.lax.Precision.HIGHEST)

    emb_d = embed(dcodes_ref, ed_ref)                                 # (tb, 128) f32
    emb_p = embed(pcodes_ref, ep_ref)
    emb_m = embed(mcodes_ref, em_ref)
    comb = jnp.concatenate([emb_d, emb_p, emb_m], axis=1)             # (tb, 384) f32

    # Fused MLP: bf16 MXU operands, f32 accumulation, f32 elementwise path
    # (ReLU / sigmoid stay f32 -> no bf16 VPU work on v5e).
    h = jnp.dot(comb.astype(jnp.bfloat16), w1_ref[...],
                preferred_element_type=jnp.float32) + b1_ref[...]
    h = jnp.maximum(h, 0.0)
    logits = jnp.dot(h.astype(jnp.bfloat16), w2_ref[...],
                     preferred_element_type=jnp.float32) + b2_ref[...]
    out_ref[...] = jax.nn.sigmoid(logits)                             # lane-dense store


# ----------------------------------------------------------------------------
# Wrapper
# ----------------------------------------------------------------------------
@functools.partial(jax.jit, static_argnames=("med_len",))
def prescription_forward(params, diag_codes, diag_lens, proc_codes, proc_lens,
                         med_codes, med_lens, *, med_len):
    """codes: (B, Lmax) int32 padded indices; lens: (B,) int32 valid counts."""
    B = diag_codes.shape[0]
    l_diag, l_proc, l_med = diag_codes.shape[1], proc_codes.shape[1], med_codes.shape[1]
    n_pad = params["w2"].shape[1]

    # Batch tile: multiple of 8 sublanes, up to 128 rows per grid step; keep the
    # grid >= 2 steps when possible so v7x can shard the batch over both TCs.
    tb = min(128, _round_up(B, 8))
    if _round_up(B, tb) == tb and tb > 8:
        tb = max(8, _round_up(tb // 2, 8))
    b_pad = _round_up(B, tb)

    def prep(codes, lens, table):
        # Rewrite invalid (l >= len) slots and padding rows to the sentinel
        # index = last (all-zero) row of the padded table, so no mask is needed
        # inside the kernel.
        sentinel = table.shape[0] - 1
        codes = codes.astype(jnp.int32)
        lmax = codes.shape[1]
        valid = (jnp.arange(lmax, dtype=jnp.int32)[None, :]
                 < lens.astype(jnp.int32)[:, None])
        codes = jnp.where(valid, codes, sentinel)
        return jnp.pad(codes, ((0, b_pad - B), (0, 0)), constant_values=sentinel)

    dc = prep(diag_codes, diag_lens, params["diag_emb"])
    pc = prep(proc_codes, proc_lens, params["proc_emb"])
    mc = prep(med_codes, med_lens, params["med_emb"])

    def tile_spec(lmax):   # per-tile code block, pipelined with compute
        return pl.BlockSpec((tb, lmax), lambda i: (i, 0))

    def whole(shape):      # full-array block, constant index_map -> VMEM resident
        return pl.BlockSpec(shape, lambda i: (0, 0))

    # Explicit VMEM budget (tables/weights are double-buffered by default).
    tables_bytes = 4 * (params["diag_emb"].size + params["proc_emb"].size
                        + params["med_emb"].size)
    weights_bytes = (2 * (params["w1"].size + params["w2"].size)
                     + 4 * (params["b1"].size + params["b2"].size))
    tile_bytes = 4 * tb * (l_diag + l_proc + l_med + 4 * n_pad)
    vmem_limit = int(min(96 << 20,
                         max(8 << 20,
                             2 * (tables_bytes + weights_bytes + tile_bytes)
                             + (2 << 20))))

    vp_d = params["diag_emb"].shape[0]
    vp_p = params["proc_emb"].shape[0]
    vp_m = params["med_emb"].shape[0]
    flops = int(2 * b_pad * EMB * (vp_d + vp_p + vp_m)                 # counts @ table
                + 2 * b_pad * (l_diag * vp_d + l_proc * vp_p + l_med * vp_m)  # one-hot
                + 2 * b_pad * (3 * EMB) * params["w1"].shape[1]
                + 2 * b_pad * params["w2"].shape[0] * n_pad)
    bytes_accessed = int(4 * b_pad * (l_diag + l_proc + l_med)
                         + tables_bytes + weights_bytes
                         + 4 * b_pad * n_pad)

    out_padded = pl.pallas_call(
        _prescription_kernel,
        out_shape=jax.ShapeDtypeStruct((b_pad, n_pad), jnp.float32),
        grid_spec=pltpu.PrefetchScalarGridSpec(
            num_scalar_prefetch=0,
            grid=(b_pad // tb,),
            in_specs=[
                tile_spec(l_diag), tile_spec(l_proc), tile_spec(l_med),
                whole(params["diag_emb"].shape),
                whole(params["proc_emb"].shape),
                whole(params["med_emb"].shape),
                whole(params["w1"].shape),
                whole(params["b1"].shape),
                whole(params["w2"].shape),
                whole(params["b2"].shape),
            ],
            out_specs=pl.BlockSpec((tb, n_pad), lambda i: (i, 0)),
        ),
        compiler_params=pltpu.CompilerParams(
            dimension_semantics=("parallel",),
            vmem_limit_bytes=vmem_limit),
        cost_estimate=pl.CostEstimate(
            flops=flops,
            transcendentals=int(b_pad * n_pad),
            bytes_accessed=bytes_accessed),
    )(dc, pc, mc,
      params["diag_emb"], params["proc_emb"], params["med_emb"],
      params["w1"], params["b1"], params["w2"], params["b2"])

    return out_padded[:B, :med_len]


# ----------------------------------------------------------------------------
# Parameter init (PyTorch defaults), with exact zero-padding for lane density
# and a zero sentinel row per embedding table.
# ----------------------------------------------------------------------------
def init_params(key, diag_len, proc_len, med_len, hidden=HIDDEN, emb_dim=EMB,
                hidden_pad=HIDDEN_PAD):
    out_pad = _round_up(med_len, 128)
    ks = jax.random.split(key, 7)
    f32 = jnp.float32

    def make_table(k, vocab):
        # +1 row guarantees at least one all-zero sentinel row; pad to 128 rows
        # for MXU/lane alignment of the counts matmul (padding rows are zero).
        vocab_pad = _round_up(vocab + 1, 128)
        t = jax.random.normal(k, (vocab, emb_dim), f32)   # nn.Embedding: N(0,1)
        return jnp.zeros((vocab_pad, emb_dim), f32).at[:vocab].set(t)

    diag_emb = make_table(ks[0], diag_len)
    proc_emb = make_table(ks[1], proc_len)
    med_emb = make_table(ks[2], med_len)

    # nn.Linear default: U(-1/sqrt(fan_in), 1/sqrt(fan_in)); stored pre-transposed.
    lim1 = 1.0 / float(3.0 * emb_dim) ** 0.5
    w1 = jax.random.uniform(ks[3], (3 * emb_dim, hidden), f32, -lim1, lim1)
    b1 = jax.random.uniform(ks[4], (hidden,), f32, -lim1, lim1)
    lim2 = 1.0 / float(hidden) ** 0.5
    w2 = jax.random.uniform(ks[5], (hidden, med_len), f32, -lim2, lim2)
    b2 = jax.random.uniform(ks[6], (med_len,), f32, -lim2, lim2)

    # Zero-pad hidden->128 and med_len->multiple of 128 (mathematically exact).
    w1_p = jnp.zeros((3 * emb_dim, hidden_pad), f32).at[:, :hidden].set(w1)
    b1_p = jnp.zeros((1, hidden_pad), f32).at[0, :hidden].set(b1)
    w2_p = jnp.zeros((hidden_pad, out_pad), f32).at[:hidden, :med_len].set(w2)
    b2_p = jnp.zeros((1, out_pad), f32).at[0, :med_len].set(b2)
    return {
        "diag_emb": diag_emb,
        "proc_emb": proc_emb,
        "med_emb": med_emb,
        "w1": w1_p.astype(jnp.bfloat16),   # bf16 MXU operands, f32 accumulation
        "b1": b1_p,
        "w2": w2_p.astype(jnp.bfloat16),
        "b2": b2_p,
    }


# ----------------------------------------------------------------------------
# Pure-JAX reference mirroring the PyTorch forward (same bf16 weights)
# ----------------------------------------------------------------------------
def reference_forward(params, diag_codes, diag_lens, proc_codes, proc_lens,
                      med_codes, med_lens, *, med_len):
    f32 = jnp.float32

    def emb_sum(table, codes, lens):
        rows = table[codes]                                      # (B, L, 128)
        mask = (jnp.arange(codes.shape[1])[None, :] < lens[:, None]).astype(f32)
        return jnp.sum(rows * mask[..., None], axis=1)

    comb = jnp.concatenate([
        emb_sum(params["diag_emb"], diag_codes, diag_lens),
        emb_sum(params["proc_emb"], proc_codes, proc_lens),
        emb_sum(params["med_emb"], med_codes, med_lens)], axis=1)
    h = jnp.dot(comb.astype(jnp.bfloat16), params["w1"],
                preferred_element_type=f32) + params["b1"]
    h = jnp.maximum(h, 0.0)
    logits = jnp.dot(h.astype(jnp.bfloat16), params["w2"],
                     preferred_element_type=f32) + params["b2"]
    return jax.nn.sigmoid(logits)[:, :med_len]


if __name__ == "__main__":
    # Small, deterministic problem sizes.
    diag_len, proc_len, med_len = 40, 24, 16
    B, Lmax = 4, 6  # 4 visits, up to 6 codes each per code type

    key = jax.random.PRNGKey(0)
    kp, kd, kpr, km, kld, klp, klm = jax.random.split(key, 7)

    params = init_params(kp, diag_len, proc_len, med_len)

    # Padded per-visit code lists (the PyTorch module takes ragged Python lists;
    # here each visit has a variable number of valid codes given by *_lens).
    diag_codes = jax.random.randint(kd, (B, Lmax), 0, diag_len, jnp.int32)
    proc_codes = jax.random.randint(kpr, (B, Lmax), 0, proc_len, jnp.int32)
    med_codes = jax.random.randint(km, (B, Lmax), 0, med_len, jnp.int32)
    diag_lens = 1 + jax.random.randint(kld, (B,), 0, Lmax, jnp.int32)
    proc_lens = 1 + jax.random.randint(klp, (B,), 0, Lmax, jnp.int32)
    med_lens = 1 + jax.random.randint(klm, (B,), 0, Lmax, jnp.int32)

    out = prescription_forward(params, diag_codes, diag_lens, proc_codes, proc_lens,
                               med_codes, med_lens, med_len=med_len)
    out = jax.block_until_ready(out)

    ref = reference_forward(params, diag_codes, diag_lens, proc_codes, proc_lens,
                            med_codes, med_lens, med_len=med_len)
    assert out.shape == (B, med_len)
    assert jnp.allclose(out, ref, atol=2e-3, rtol=2e-3), "mismatch vs JAX reference"

    print("KERNEL_OK")
</pallas_src>

<mosaic_0001>
module attributes {stable_mosaic.version = 11 : i64} {
  func.func @_prescription_kernel(%arg0: i32, %arg1: memref<8x6xi32, #tpu.memory_space<vmem>>, %arg2: memref<8x6xi32, #tpu.memory_space<vmem>>, %arg3: memref<8x6xi32, #tpu.memory_space<vmem>>, %arg4: memref<128x128xf32, #tpu.memory_space<vmem>>, %arg5: memref<128x128xf32, #tpu.memory_space<vmem>>, %arg6: memref<128x128xf32, #tpu.memory_space<vmem>>, %arg7: memref<384x128xbf16, #tpu.memory_space<vmem>>, %arg8: memref<1x128xf32, #tpu.memory_space<vmem>>, %arg9: memref<128x128xbf16, #tpu.memory_space<vmem>>, %arg10: memref<1x128xf32, #tpu.memory_space<vmem>>, %arg11: memref<8x128xf32, #tpu.memory_space<vmem>>) attributes {dimension_semantics = [#tpu.dimension_semantics<parallel>], iteration_bounds = array<i64: 1>, scalar_prefetch = 0 : i64, scratch_operands = 0 : i64, tpu.core_type = #tpu.core_type<tc>, window_params = [{transform_indices = @transform_0, window_bounds = array<i64: 8, 6>}, {transform_indices = @transform_1, window_bounds = array<i64: 8, 6>}, {transform_indices = @transform_2, window_bounds = array<i64: 8, 6>}, {pipeline_mode = #tpu.pipeline_mode<synchronous>, transform_indices = @transform_3, window_bounds = array<i64: 128, 128>}, {pipeline_mode = #tpu.pipeline_mode<synchronous>, transform_indices = @transform_4, window_bounds = array<i64: 128, 128>}, {pipeline_mode = #tpu.pipeline_mode<synchronous>, transform_indices = @transform_5, window_bounds = array<i64: 128, 128>}, {pipeline_mode = #tpu.pipeline_mode<synchronous>, transform_indices = @transform_6, window_bounds = array<i64: 384, 128>}, {pipeline_mode = #tpu.pipeline_mode<synchronous>, transform_indices = @transform_7, window_bounds = array<i64: 1, 128>}, {pipeline_mode = #tpu.pipeline_mode<synchronous>, transform_indices = @transform_8, window_bounds = array<i64: 128, 128>}, {pipeline_mode = #tpu.pipeline_mode<synchronous>, transform_indices = @transform_9, window_bounds = array<i64: 1, 128>}, {transform_indices = @transform_10, window_bounds = array<i64: 8, 128>}]} {
    %c0 = arith.constant 0 : index
    %c0_0 = arith.constant 0 : index
    %0 = vector.load %arg1[%c0, %c0_0] : memref<8x6xi32, #tpu.memory_space<vmem>>, vector<8x6xi32>
    %1 = tpu.iota {dimensions = array<i32: 1>} : vector<8x128xi32>
    %cst = arith.constant 0.000000e+00 : f32
    %2 = vector.broadcast %cst : f32 to vector<8x128xf32>
    %3 = vector.extract_strided_slice %0 {offsets = [0, 0], sizes = [8, 1], strides = [1, 1]} : vector<8x6xi32> to vector<8x1xi32>
    %4 = vector.broadcast %3 : vector<8x1xi32> to vector<8x128xi32>
    %5 = arith.cmpi eq, %4, %1 : vector<8x128xi32>
    %cst_1 = arith.constant 1.000000e+00 : f32
    %cst_2 = arith.constant 0.000000e+00 : f32
    %6 = vector.broadcast %cst_1 : f32 to vector<8x128xf32>
    %7 = vector.broadcast %cst_2 : f32 to vector<8x128xf32>
    %8 = arith.select %5, %6, %7 : vector<8x128xi1>, vector<8x128xf32>
    %9 = arith.addf %2, %8 : vector<8x128xf32>
    %10 = vector.extract_strided_slice %0 {offsets = [0, 1], sizes = [8, 1], strides = [1, 1]} : vector<8x6xi32> to vector<8x1xi32>
    %11 = vector.broadcast %10 : vector<8x1xi32> to vector<8x128xi32>
    %12 = arith.cmpi eq, %11, %1 : vector<8x128xi32>
    %cst_3 = arith.constant 1.000000e+00 : f32
    %cst_4 = arith.constant 0.000000e+00 : f32
    %13 = vector.broadcast %cst_3 : f32 to vector<8x128xf32>
    %14 = vector.broadcast %cst_4 : f32 to vector<8x128xf32>
    %15 = arith.select %12, %13, %14 : vector<8x128xi1>, vector<8x128xf32>
    %16 = arith.addf %9, %15 : vector<8x128xf32>
    %17 = vector.extract_strided_slice %0 {offsets = [0, 2], sizes = [8, 1], strides = [1, 1]} : vector<8x6xi32> to vector<8x1xi32>
    %18 = vector.broadcast %17 : vector<8x1xi32> to vector<8x128xi32>
    %19 = arith.cmpi eq, %18, %1 : vector<8x128xi32>
    %cst_5 = arith.constant 1.000000e+00 : f32
    %cst_6 = arith.constant 0.000000e+00 : f32
    %20 = vector.broadcast %cst_5 : f32 to vector<8x128xf32>
    %21 = vector.broadcast %cst_6 : f32 to vector<8x128xf32>
    %22 = arith.select %19, %20, %21 : vector<8x128xi1>, vector<8x128xf32>
    %23 = arith.addf %16, %22 : vector<8x128xf32>
    %24 = vector.extract_strided_slice %0 {offsets = [0, 3], sizes = [8, 1], strides = [1, 1]} : vector<8x6xi32> to vector<8x1xi32>
    %25 = vector.broadcast %24 : vector<8x1xi32> to vector<8x128xi32>
    %26 = arith.cmpi eq, %25, %1 : vector<8x128xi32>
    %cst_7 = arith.constant 1.000000e+00 : f32
    %cst_8 = arith.constant 0.000000e+00 : f32
    %27 = vector.broadcast %cst_7 : f32 to vector<8x128xf32>
    %28 = vector.broadcast %cst_8 : f32 to vector<8x128xf32>
    %29 = arith.select %26, %27, %28 : vector<8x128xi1>, vector<8x128xf32>
    %30 = arith.addf %23, %29 : vector<8x128xf32>
    %31 = vector.extract_strided_slice %0 {offsets = [0, 4], sizes = [8, 1], strides = [1, 1]} : vector<8x6xi32> to vector<8x1xi32>
    %32 = vector.broadcast %31 : vector<8x1xi32> to vector<8x128xi32>
    %33 = arith.cmpi eq, %32, %1 : vector<8x128xi32>
    %cst_9 = arith.constant 1.000000e+00 : f32
    %cst_10 = arith.constant 0.000000e+00 : f32
    %34 = vector.broadcast %cst_9 : f32 to vector<8x128xf32>
    %35 = vector.broadcast %cst_10 : f32 to vector<8x128xf32>
    %36 = arith.select %33, %34, %35 : vector<8x128xi1>, vector<8x128xf32>
    %37 = arith.addf %30, %36 : vector<8x128xf32>
    %38 = vector.extract_strided_slice %0 {offsets = [0, 5], sizes = [8, 1], strides = [1, 1]} : vector<8x6xi32> to vector<8x1xi32>
    %39 = vector.broadcast %38 : vector<8x1xi32> to vector<8x128xi32>
    %40 = arith.cmpi eq, %39, %1 : vector<8x128xi32>
    %cst_11 = arith.constant 1.000000e+00 : f32
    %cst_12 = arith.constant 0.000000e+00 : f32
    %41 = vector.broadcast %cst_11 : f32 to vector<8x128xf32>
    %42 = vector.broadcast %cst_12 : f32 to vector<8x128xf32>
    %43 = arith.select %40, %41, %42 : vector<8x128xi1>, vector<8x128xf32>
    %44 = arith.addf %37, %43 : vector<8x128xf32>
    %c0_13 = arith.constant 0 : index
    %c0_14 = arith.constant 0 : index
    %45 = vector.load %arg4[%c0_13, %c0_14] : memref<128x128xf32, #tpu.memory_space<vmem>>, vector<128x128xf32>
    %cst_15 = arith.constant dense<0.000000e+00> : vector<8x128xf32>
    %46 = tpu.matmul %44, %45, %cst_15 {dimension_numbers = #tpu.dot_dimension_numbers<[1], [0], [0], [1], [0, 0, 1, 1], [], []>, precision = #tpu.contract_precision<fp32>} : vector<8x128xf32>, vector<128x128xf32>, vector<8x128xf32> -> vector<8x128xf32>
    %c0_16 = arith.constant 0 : index
    %c0_17 = arith.constant 0 : index
    %47 = vector.load %arg2[%c0_16, %c0_17] : memref<8x6xi32, #tpu.memory_space<vmem>>, vector<8x6xi32>
    %48 = tpu.iota {dimensions = array<i32: 1>} : vector<8x128xi32>
    %cst_18 = arith.constant 0.000000e+00 : f32
    %49 = vector.broadcast %cst_18 : f32 to vector<8x128xf32>
    %50 = vector.extract_strided_slice %47 {offsets = [0, 0], sizes = [8, 1], strides = [1, 1]} : vector<8x6xi32> to vector<8x1xi32>
    %51 = vector.broadcast %50 : vector<8x1xi32> to vector<8x128xi32>
    %52 = arith.cmpi eq, %51, %48 : vector<8x128xi32>
    %cst_19 = arith.constant 1.000000e+00 : f32
    %cst_20 = arith.constant 0.000000e+00 : f32
    %53 = vector.broadcast %cst_19 : f32 to vector<8x128xf32>
    %54 = vector.broadcast %cst_20 : f32 to vector<8x128xf32>
    %55 = arith.select %52, %53, %54 : vector<8x128xi1>, vector<8x128xf32>
    %56 = arith.addf %49, %55 : vector<8x128xf32>
    %57 = vector.extract_strided_slice %47 {offsets = [0, 1], sizes = [8, 1], strides = [1, 1]} : vector<8x6xi32> to vector<8x1xi32>
    %58 = vector.broadcast %57 : vector<8x1xi32> to vector<8x128xi32>
    %59 = arith.cmpi eq, %58, %48 : vector<8x128xi32>
    %cst_21 = arith.constant 1.000000e+00 : f32
    %cst_22 = arith.constant 0.000000e+00 : f32
    %60 = vector.broadcast %cst_21 : f32 to vector<8x128xf32>
    %61 = vector.broadcast %cst_22 : f32 to vector<8x128xf32>
    %62 = arith.select %59, %60, %61 : vector<8x128xi1>, vector<8x128xf32>
    %63 = arith.addf %56, %62 : vector<8x128xf32>
    %64 = vector.extract_strided_slice %47 {offsets = [0, 2], sizes = [8, 1], strides = [1, 1]} : vector<8x6xi32> to vector<8x1xi32>
    %65 = vector.broadcast %64 : vector<8x1xi32> to vector<8x128xi32>
    %66 = arith.cmpi eq, %65, %48 : vector<8x128xi32>
    %cst_23 = arith.constant 1.000000e+00 : f32
    %cst_24 = arith.constant 0.000000e+00 : f32
    %67 = vector.broadcast %cst_23 : f32 to vector<8x128xf32>
    %68 = vector.broadcast %cst_24 : f32 to vector<8x128xf32>
    %69 = arith.select %66, %67, %68 : vector<8x128xi1>, vector<8x128xf32>
    %70 = arith.addf %63, %69 : vector<8x128xf32>
    %71 = vector.extract_strided_slice %47 {offsets = [0, 3], sizes = [8, 1], strides = [1, 1]} : vector<8x6xi32> to vector<8x1xi32>
    %72 = vector.broadcast %71 : vector<8x1xi32> to vector<8x128xi32>
    %73 = arith.cmpi eq, %72, %48 : vector<8x128xi32>
    %cst_25 = arith.constant 1.000000e+00 : f32
    %cst_26 = arith.constant 0.000000e+00 : f32
    %74 = vector.broadcast %cst_25 : f32 to vector<8x128xf32>
    %75 = vector.broadcast %cst_26 : f32 to vector<8x128xf32>
    %76 = arith.select %73, %74, %75 : vector<8x128xi1>, vector<8x128xf32>
    %77 = arith.addf %70, %76 : vector<8x128xf32>
    %78 = vector.extract_strided_slice %47 {offsets = [0, 4], sizes = [8, 1], strides = [1, 1]} : vector<8x6xi32> to vector<8x1xi32>
    %79 = vector.broadcast %78 : vector<8x1xi32> to vector<8x128xi32>
    %80 = arith.cmpi eq, %79, %48 : vector<8x128xi32>
    %cst_27 = arith.constant 1.000000e+00 : f32
    %cst_28 = arith.constant 0.000000e+00 : f32
    %81 = vector.broadcast %cst_27 : f32 to vector<8x128xf32>
    %82 = vector.broadcast %cst_28 : f32 to vector<8x128xf32>
    %83 = arith.select %80, %81, %82 : vector<8x128xi1>, vector<8x128xf32>
    %84 = arith.addf %77, %83 : vector<8x128xf32>
    %85 = vector.extract_strided_slice %47 {offsets = [0, 5], sizes = [8, 1], strides = [1, 1]} : vector<8x6xi32> to vector<8x1xi32>
    %86 = vector.broadcast %85 : vector<8x1xi32> to vector<8x128xi32>
    %87 = arith.cmpi eq, %86, %48 : vector<8x128xi32>
    %cst_29 = arith.constant 1.000000e+00 : f32
    %cst_30 = arith.constant 0.000000e+00 : f32
    %88 = vector.broadcast %cst_29 : f32 to vector<8x128xf32>
    %89 = vector.broadcast %cst_30 : f32 to vector<8x128xf32>
    %90 = arith.select %87, %88, %89 : vector<8x128xi1>, vector<8x128xf32>
    %91 = arith.addf %84, %90 : vector<8x128xf32>
    %c0_31 = arith.constant 0 : index
    %c0_32 = arith.constant 0 : index
    %92 = vector.load %arg5[%c0_31, %c0_32] : memref<128x128xf32, #tpu.memory_space<vmem>>, vector<128x128xf32>
    %cst_33 = arith.constant dense<0.000000e+00> : vector<8x128xf32>
    %93 = tpu.matmul %91, %92, %cst_33 {dimension_numbers = #tpu.dot_dimension_numbers<[1], [0], [0], [1], [0, 0, 1, 1], [], []>, precision = #tpu.contract_precision<fp32>} : vector<8x128xf32>, vector<128x128xf32>, vector<8x128xf32> -> vector<8x128xf32>
    %c0_34 = arith.constant 0 : index
    %c0_35 = arith.constant 0 : index
    %94 = vector.load %arg3[%c0_34, %c0_35] : memref<8x6xi32, #tpu.memory_space<vmem>>, vector<8x6xi32>
    %95 = tpu.iota {dimensions = array<i32: 1>} : vector<8x128xi32>
    %cst_36 = arith.constant 0.000000e+00 : f32
    %96 = vector.broadcast %cst_36 : f32 to vector<8x128xf32>
    %97 = vector.extract_strided_slice %94 {offsets = [0, 0], sizes = [8, 1], strides = [1, 1]} : vector<8x6xi32> to vector<8x1xi32>
    %98 = vector.broadcast %97 : vector<8x1xi32> to vector<8x128xi32>
    %99 = arith.cmpi eq, %98, %95 : vector<8x128xi32>
    %cst_37 = arith.constant 1.000000e+00 : f32
    %cst_38 = arith.constant 0.000000e+00 : f32
    %100 = vector.broadcast %cst_37 : f32 to vector<8x128xf32>
    %101 = vector.broadcast %cst_38 : f32 to vector<8x128xf32>
    %102 = arith.select %99, %100, %101 : vector<8x128xi1>, vector<8x128xf32>
    %103 = arith.addf %96, %102 : vector<8x128xf32>
    %104 = vector.extract_strided_slice %94 {offsets = [0, 1], sizes = [8, 1], strides = [1, 1]} : vector<8x6xi32> to vector<8x1xi32>
    %105 = vector.broadcast %104 : vector<8x1xi32> to vector<8x128xi32>
    %106 = arith.cmpi eq, %105, %95 : vector<8x128xi32>
    %cst_39 = arith.constant 1.000000e+00 : f32
    %cst_40 = arith.constant 0.000000e+00 : f32
    %107 = vector.broadcast %cst_39 : f32 to vector<8x128xf32>
    %108 = vector.broadcast %cst_40 : f32 to vector<8x128xf32>
    %109 = arith.select %106, %107, %108 : vector<8x128xi1>, vector<8x128xf32>
    %110 = arith.addf %103, %109 : vector<8x128xf32>
    %111 = vector.extract_strided_slice %94 {offsets = [0, 2], sizes = [8, 1], strides = [1, 1]} : vector<8x6xi32> to vector<8x1xi32>
    %112 = vector.broadcast %111 : vector<8x1xi32> to vector<8x128xi32>
    %113 = arith.cmpi eq, %112, %95 : vector<8x128xi32>
    %cst_41 = arith.constant 1.000000e+00 : f32
    %cst_42 = arith.constant 0.000000e+00 : f32
    %114 = vector.broadcast %cst_41 : f32 to vector<8x128xf32>
    %115 = vector.broadcast %cst_42 : f32 to vector<8x128xf32>
    %116 = arith.select %113, %114, %115 : vector<8x128xi1>, vector<8x128xf32>
    %117 = arith.addf %110, %116 : vector<8x128xf32>
    %118 = vector.extract_strided_slice %94 {offsets = [0, 3], sizes = [8, 1], strides = [1, 1]} : vector<8x6xi32> to vector<8x1xi32>
    %119 = vector.broadcast %118 : vector<8x1xi32> to vector<8x128xi32>
    %120 = arith.cmpi eq, %119, %95 : vector<8x128xi32>
    %cst_43 = arith.constant 1.000000e+00 : f32
    %cst_44 = arith.constant 0.000000e+00 : f32
    %121 = vector.broadcast %cst_43 : f32 to vector<8x128xf32>
    %122 = vector.broadcast %cst_44 : f32 to vector<8x128xf32>
    %123 = arith.select %120, %121, %122 : vector<8x128xi1>, vector<8x128xf32>
    %124 = arith.addf %117, %123 : vector<8x128xf32>
    %125 = vector.extract_strided_slice %94 {offsets = [0, 4], sizes = [8, 1], strides = [1, 1]} : vector<8x6xi32> to vector<8x1xi32>
    %126 = vector.broadcast %125 : vector<8x1xi32> to vector<8x128xi32>
    %127 = arith.cmpi eq, %126, %95 : vector<8x128xi32>
    %cst_45 = arith.constant 1.000000e+00 : f32
    %cst_46 = arith.constant 0.000000e+00 : f32
    %128 = vector.broadcast %cst_45 : f32 to vector<8x128xf32>
    %129 = vector.broadcast %cst_46 : f32 to vector<8x128xf32>
    %130 = arith.select %127, %128, %129 : vector<8x128xi1>, vector<8x128xf32>
    %131 = arith.addf %124, %130 : vector<8x128xf32>
    %132 = vector.extract_strided_slice %94 {offsets = [0, 5], sizes = [8, 1], strides = [1, 1]} : vector<8x6xi32> to vector<8x1xi32>
    %133 = vector.broadcast %132 : vector<8x1xi32> to vector<8x128xi32>
    %134 = arith.cmpi eq, %133, %95 : vector<8x128xi32>
    %cst_47 = arith.constant 1.000000e+00 : f32
    %cst_48 = arith.constant 0.000000e+00 : f32
    %135 = vector.broadcast %cst_47 : f32 to vector<8x128xf32>
    %136 = vector.broadcast %cst_48 : f32 to vector<8x128xf32>
    %137 = arith.select %134, %135, %136 : vector<8x128xi1>, vector<8x128xf32>
    %138 = arith.addf %131, %137 : vector<8x128xf32>
    %c0_49 = arith.constant 0 : index
    %c0_50 = arith.constant 0 : index
    %139 = vector.load %arg6[%c0_49, %c0_50] : memref<128x128xf32, #tpu.memory_space<vmem>>, vector<128x128xf32>
    %cst_51 = arith.constant dense<0.000000e+00> : vector<8x128xf32>
    %140 = tpu.matmul %138, %139, %cst_51 {dimension_numbers = #tpu.dot_dimension_numbers<[1], [0], [0], [1], [0, 0, 1, 1], [], []>, precision = #tpu.contract_precision<fp32>} : vector<8x128xf32>, vector<128x128xf32>, vector<8x128xf32> -> vector<8x128xf32>
    %141 = tpu.concatenate %46, %93, %140 in 1 : vector<8x128xf32>, vector<8x128xf32>, vector<8x128xf32> -> vector<8x384xf32>
    %142 = arith.truncf %141 : vector<8x384xf32> to vector<8x384xbf16>
    %c0_52 = arith.constant 0 : index
    %c0_53 = arith.constant 0 : index
    %143 = vector.load %arg7[%c0_52, %c0_53] : memref<384x128xbf16, #tpu.memory_space<vmem>>, vector<384x128xbf16>
    %cst_54 = arith.constant dense<0.000000e+00> : vector<8x128xf32>
    %144 = tpu.matmul %142, %143, %cst_54 {dimension_numbers = #tpu.dot_dimension_numbers<[1], [0], [0], [1], [0, 0, 1, 1], [], []>} : vector<8x384xbf16>, vector<384x128xbf16>, vector<8x128xf32> -> vector<8x128xf32>
    %c0_55 = arith.constant 0 : index
    %c0_56 = arith.constant 0 : index
    %145 = vector.load %arg8[%c0_55, %c0_56] : memref<1x128xf32, #tpu.memory_space<vmem>>, vector<1x128xf32>
    %146 = vector.broadcast %145 : vector<1x128xf32> to vector<8x128xf32>
    %147 = arith.addf %144, %146 : vector<8x128xf32>
    %cst_57 = arith.constant 0.000000e+00 : f32
    %148 = vector.broadcast %cst_57 : f32 to vector<8x128xf32>
    %149 = arith.maximumf %147, %148 : vector<8x128xf32>
    %150 = arith.truncf %149 : vector<8x128xf32> to vector<8x128xbf16>
    %c0_58 = arith.constant 0 : index
    %c0_59 = arith.constant 0 : index
    %151 = vector.load %arg9[%c0_58, %c0_59] : memref<128x128xbf16, #tpu.memory_space<vmem>>, vector<128x128xbf16>
    %cst_60 = arith.constant dense<0.000000e+00> : vector<8x128xf32>
    %152 = tpu.matmul %150, %151, %cst_60 {dimension_numbers = #tpu.dot_dimension_numbers<[1], [0], [0], [1], [0, 0, 1, 1], [], []>} : vector<8x128xbf16>, vector<128x128xbf16>, vector<8x128xf32> -> vector<8x128xf32>
    %c0_61 = arith.constant 0 : index
    %c0_62 = arith.constant 0 : index
    %153 = vector.load %arg10[%c0_61, %c0_62] : memref<1x128xf32, #tpu.memory_space<vmem>>, vector<1x128xf32>
    %154 = vector.broadcast %153 : vector<1x128xf32> to vector<8x128xf32>
    %155 = arith.addf %152, %154 : vector<8x128xf32>
    %156 = arith.negf %155 : vector<8x128xf32>
    %157 = math.exp %156 : vector<8x128xf32>
    %cst_63 = arith.constant 1.000000e+00 : f32
    %158 = vector.broadcast %cst_63 : f32 to vector<8x128xf32>
    %159 = arith.addf %158, %157 : vector<8x128xf32>
    %160 = arith.divf %158, %159 : vector<8x128xf32>
    %c0_64 = arith.constant 0 : index
    %c0_65 = arith.constant 0 : index
    %161 = vector.load %arg11[%c0_64, %c0_65] : memref<8x128xf32, #tpu.memory_space<vmem>>, vector<8x128xf32>
    tpu.vector_store %arg11[%c0_64, %c0_65], %160 {strides = array<i32>} : memref<8x128xf32, #tpu.memory_space<vmem>>, vector<8x128xf32>,
    return
  }
  func.func @transform_0(%arg0: i32) -> (i32, i32) {
    %c0_i32 = arith.constant 0 : i32
    %c0_i32_0 = arith.constant 0 : i32
    return %arg0, %c0_i32 : i32, i32
  }
  func.func @transform_1(%arg0: i32) -> (i32, i32) {
    %c0_i32 = arith.constant 0 : i32
    %c0_i32_0 = arith.constant 0 : i32
    return %arg0, %c0_i32 : i32, i32
  }
  func.func @transform_2(%arg0: i32) -> (i32, i32) {
    %c0_i32 = arith.constant 0 : i32
    %c0_i32_0 = arith.constant 0 : i32
    return %arg0, %c0_i32 : i32, i32
  }
  func.func @transform_3(%arg0: i32) -> (i32, i32) {
    %c0_i32 = arith.constant 0 : i32
    %c0_i32_0 = arith.constant 0 : i32
    %c0_i32_1 = arith.constant 0 : i32
    return %c0_i32, %c0_i32_0 : i32, i32
  }
  func.func @transform_4(%arg0: i32) -> (i32, i32) {
    %c0_i32 = arith.constant 0 : i32
    %c0_i32_0 = arith.constant 0 : i32
    %c0_i32_1 = arith.constant 0 : i32
    return %c0_i32, %c0_i32_0 : i32, i32
  }
  func.func @transform_5(%arg0: i32) -> (i32, i32) {
    %c0_i32 = arith.constant 0 : i32
    %c0_i32_0 = arith.constant 0 : i32
    %c0_i32_1 = arith.constant 0 : i32
    return %c0_i32, %c0_i32_0 : i32, i32
  }
  func.func @transform_6(%arg0: i32) -> (i32, i32) {
    %c0_i32 = arith.constant 0 : i32
    %c0_i32_0 = arith.constant 0 : i32
    %c0_i32_1 = arith.constant 0 : i32
    return %c0_i32, %c0_i32_0 : i32, i32
  }
  func.func @transform_7(%arg0: i32) -> (i32, i32) {
    %c0_i32 = arith.constant 0 : i32
    %c0_i32_0 = arith.constant 0 : i32
    %c0_i32_1 = arith.constant 0 : i32
    return %c0_i32, %c0_i32_0 : i32, i32
  }
  func.func @transform_8(%arg0: i32) -> (i32, i32) {
    %c0_i32 = arith.constant 0 : i32
    %c0_i32_0 = arith.constant 0 : i32
    %c0_i32_1 = arith.constant 0 : i32
    return %c0_i32, %c0_i32_0 : i32, i32
  }
  func.func @transform_9(%arg0: i32) -> (i32, i32) {
    %c0_i32 = arith.constant 0 : i32
    %c0_i32_0 = arith.constant 0 : i32
    %c0_i32_1 = arith.constant 0 : i32
    return %c0_i32, %c0_i32_0 : i32, i32
  }
  func.func @transform_10(%arg0: i32) -> (i32, i32) {
    %c0_i32 = arith.constant 0 : i32
    %c0_i32_0 = arith.constant 0 : i32
    return %arg0, %c0_i32 : i32, i32
  }
}

</mosaic_0001>

<llo_original>
// kernel: prescription_forward.1
$region0: #{prescription_forward.1}
  #allocation0 [shape = 'u32[]', space=smem, size = 0x4, offset = 0x4, fixed_abs, tag = 'smem constant byte address 0x4 - core index']
  #allocation1 [shape = 'u32[144,128]{1,0:T(1,128)}', space=vmem, size = 0x12000, scoped, tag = 'internal scratch']
  %s0 = inlined_call_operand.vmem [shape: s32[8,6], index: 0, kind: input, shape index: {}]
  %s1 = inlined_call_operand.vmem [shape: s32[8,6], index: 1, kind: input, shape index: {}]
  %s2 = inlined_call_operand.vmem [shape: s32[8,6], index: 2, kind: input, shape index: {}]
  %s3 = inlined_call_operand.hbm [shape: f32[128,128], index: 3, kind: input, shape index: {}]
  %s4 = inlined_call_operand.hbm [shape: f32[128,128], index: 4, kind: input, shape index: {}]
  %s5 = inlined_call_operand.hbm [shape: f32[128,128], index: 5, kind: input, shape index: {}]
  %s6 = inlined_call_operand.hbm [shape: bf16[384,128], index: 6, kind: input, shape index: {}]
  %s7 = inlined_call_operand.hbm [shape: f32[1,128], index: 7, kind: input, shape index: {}]
  %s8 = inlined_call_operand.vmem [shape: bf16[128,128], index: 8, kind: input, shape index: {}]
  %s9 = inlined_call_operand.hbm [shape: f32[1,128], index: 9, kind: input, shape index: {}]
  %s10 = inlined_call_operand.vmem [shape: f32[8,128], index: 10, kind: output, shape index: {}]
  %s11 = sld [smem:[#allocation0]]
  $region74: #{prescription_forward.1} parent=0
    _
  %s13 = ssub.s32 1, %s11
  %s14 = scalar_select 0, %s13, %s11
  $region1: #{prescription_forward.1} parent=0
    #allocation2 [shape = 'u8[65536]{0}', space=vmem, size = 0x10000, scoped, tag = 'input window, operand 3, single buffered']
    #allocation3 [shape = 's32[1]{0}', space=sflag, size = 0x4, scoped, tag = 'scoped memory for prescription_forward.1']
    #allocation4 [shape = 'u8[65536]{0}', space=vmem, size = 0x10000, scoped, tag = 'input window, operand 4, single buffered']
    #allocation5 [shape = 's32[1]{0}', space=sflag, size = 0x4, scoped, tag = 'scoped memory for prescription_forward.1']
    #allocation6 [shape = 'u8[65536]{0}', space=vmem, size = 0x10000, scoped, tag = 'input window, operand 5, single buffered']
    #allocation7 [shape = 'u8[98304]{0}', space=vmem, size = 0x18000, scoped, tag = 'input window, operand 6, single buffered']
    #allocation8 [shape = 's32[1]{0}', space=sflag, size = 0x4, scoped, tag = 'scoped memory for prescription_forward.1']
    #allocation9 [shape = 'u8[512]{0}', space=vmem, size = 0x400, scoped, tag = 'input window, operand 7, single buffered']
    #allocation10 [shape = 'u8[512]{0}', space=vmem, size = 0x400, scoped, tag = 'input window, operand 9, single buffered']
    #allocation11 [shape = 's32[1]{0}', space=sflag, size = 0x4, scoped, tag = 'scoped memory for prescription_forward.1']
    %15 = vsyncpa [#allocation3], 0
    %16 = vsyncpa [#allocation5], 0
    %17 = vsyncpa [#allocation8], 0
    %18 = vsyncpa [#allocation11], 0
    // Predicated region
    $region2: #{prescription_forward.1} parent=1 // pred_check
      _
    $region3: #{prescription_forward.1} parent=1 // pred_check_branch
      %20 = sbr.rel (0) target = $region5
    $region4: #{prescription_forward.1} parent=1 // pred_region
      _
    $region5: #{prescription_forward.1} parent=1 // pred_fallthru
      _
    // Predicated region
    $region6: #{prescription_forward.1} parent=1 // pred_check
      _
    $region7: #{prescription_forward.1} parent=1 // pred_check_branch
      %22 = sbr.rel (0) target = $region9
    $region8: #{prescription_forward.1} parent=1 // pred_region
      _
    $region9: #{prescription_forward.1} parent=1 // pred_fallthru
      _
    // Predicated region
    $region10: #{prescription_forward.1} parent=1 // pred_check
      _
    $region11: #{prescription_forward.1} parent=1 // pred_check_branch
      %24 = sbr.rel (0) target = $region13
    $region12: #{prescription_forward.1} parent=1 // pred_region
      _
    $region13: #{prescription_forward.1} parent=1 // pred_fallthru
      _
    // Predicated region
    $region14: #{prescription_forward.1} parent=1 // pred_check
      _
    $region15: #{prescription_forward.1} parent=1 // pred_check_branch
      %26 = sbr.rel (0) target = $region17
    $region16: #{prescription_forward.1} parent=1 // pred_region
      %s28 = ssub.s32 2048, 2048
      %29 = vsyncadd [#allocation3], %s28
      %s30 = sshll.u32 [#allocation2], 4
      %s31 = int_to_ptr.vmem [resolvable:$true] %s30
      %36 = dma.hbm_to_vmem [thread:$0]  %s3, 2048, %s31, [#allocation3], 128, 128, 8
    $region17: #{prescription_forward.1} parent=1 // pred_fallthru
      _
    // Predicated region
    $region18: #{prescription_forward.1} parent=1 // pred_check
      _
    $region19: #{prescription_forward.1} parent=1 // pred_check_branch
      %38 = sbr.rel (0) target = $region21
    $region20: #{prescription_forward.1} parent=1 // pred_region
      %s40 = ssub.s32 2048, 2048
      %41 = vsyncadd [#allocation5], %s40
      %s42 = sshll.u32 [#allocation4], 4
      %s43 = int_to_ptr.vmem [resolvable:$true] %s42
      %48 = dma.hbm_to_vmem [thread:$0]  %s4, 2048, %s43, [#allocation5], 128, 128, 8
    $region21: #{prescription_forward.1} parent=1 // pred_fallthru
      _
    // Predicated region
    $region22: #{prescription_forward.1} parent=1 // pred_check
      _
    $region23: #{prescription_forward.1} parent=1 // pred_check_branch
      %50 = sbr.rel (0) target = $region25
    $region24: #{prescription_forward.1} parent=1 // pred_region
      %s52 = ssub.s32 2048, 2048
      %53 = vsyncadd [#allocation5], %s52
      %s54 = sshll.u32 [#allocation6], 4
      %s55 = int_to_ptr.vmem [resolvable:$true] %s54
      %60 = dma.hbm_to_vmem [thread:$0]  %s5, 2048, %s55, [#allocation5], 128, 128, 8
    $region25: #{prescription_forward.1} parent=1 // pred_fallthru
      _
    // Predicated region
    $region26: #{prescription_forward.1} parent=1 // pred_check
      _
    $region27: #{prescription_forward.1} parent=1 // pred_check_branch
      %62 = sbr.rel (0) target = $region29
    $region28: #{prescription_forward.1} parent=1 // pred_region
      %s64 = ssub.s32 3072, 3072
      %65 = vsyncadd [#allocation8], %s64
      %s66 = sshll.u32 [#allocation7], 4
      %s67 = int_to_ptr.vmem [resolvable:$true] %s66
      %72 = dma.hbm_to_vmem [thread:$0]  %s6, 3072, %s67, [#allocation8], 64, 64, 4
    $region29: #{prescription_forward.1} parent=1 // pred_fallthru
      _
    // Predicated region
    $region30: #{prescription_forward.1} parent=1 // pred_check
      _
    $region31: #{prescription_forward.1} parent=1 // pred_check_branch
      %74 = sbr.rel (0) target = $region33
    $region32: #{prescription_forward.1} parent=1 // pred_region
      %s76 = ssub.s32 16, 16
      %77 = vsyncadd [#allocation8], %s76
      %s79 = sshll.u32 [#allocation9], 4
      %s80 = int_to_ptr.vmem [resolvable:$true] %s79
      %82 = dma.hbm_to_vmem [thread:$0]  %s7, 16, %s80, [#allocation8]
    $region33: #{prescription_forward.1} parent=1 // pred_fallthru
      _
    // Predicated region
    $region34: #{prescription_forward.1} parent=1 // pred_check
      _
    $region35: #{prescription_forward.1} parent=1 // pred_check_branch
      %84 = sbr.rel (0) target = $region37
    $region36: #{prescription_forward.1} parent=1 // pred_region
      _
    $region37: #{prescription_forward.1} parent=1 // pred_fallthru
      _
    // Predicated region
    $region38: #{prescription_forward.1} parent=1 // pred_check
      _
    $region39: #{prescription_forward.1} parent=1 // pred_check_branch
      %86 = sbr.rel (0) target = $region41
    $region40: #{prescription_forward.1} parent=1 // pred_region
      %s88 = ssub.s32 16, 16
      %89 = vsyncadd [#allocation11], %s88
      %s91 = sshll.u32 [#allocation10], 4
      %s92 = int_to_ptr.vmem [resolvable:$true] %s91
      %94 = dma.hbm_to_vmem [thread:$0]  %s9, 16, %s92, [#allocation11]
    $region41: #{prescription_forward.1} parent=1 // pred_fallthru
      _
    // Predicated region
    $region42: #{prescription_forward.1} parent=1 // pred_check
      _
    $region43: #{prescription_forward.1} parent=1 // pred_check_branch
      %96 = sbr.rel (0) target = $region45
    $region44: #{prescription_forward.1} parent=1 // pred_region
      %97 = dma.done [#allocation3], 2048
    $region45: #{prescription_forward.1} parent=1 // pred_fallthru
      _
    // Predicated region
    $region46: #{prescription_forward.1} parent=1 // pred_check
      _
    $region47: #{prescription_forward.1} parent=1 // pred_check_branch
      %99 = sbr.rel (0) target = $region49
    $region48: #{prescription_forward.1} parent=1 // pred_region
      %100 = dma.done [#allocation5], 2048
    $region49: #{prescription_forward.1} parent=1 // pred_fallthru
      _
    // Predicated region
    $region50: #{prescription_forward.1} parent=1 // pred_check
      _
    $region51: #{prescription_forward.1} parent=1 // pred_check_branch
      %102 = sbr.rel (0) target = $region53
    $region52: #{prescription_forward.1} parent=1 // pred_region
      %103 = dma.done [#allocation5], 2048
    $region53: #{prescription_forward.1} parent=1 // pred_fallthru
      _
    // Predicated region
    $region54: #{prescription_forward.1} parent=1 // pred_check
      _
    $region55: #{prescription_forward.1} parent=1 // pred_check_branch
      %105 = sbr.rel (0) target = $region57
    $region56: #{prescription_forward.1} parent=1 // pred_region
      %106 = dma.done [#allocation8], 3072
    $region57: #{prescription_forward.1} parent=1 // pred_fallthru
      _
    // Predicated region
    $region58: #{prescription_forward.1} parent=1 // pred_check
      _
    $region59: #{prescription_forward.1} parent=1 // pred_check_branch
      %108 = sbr.rel (0) target = $region61
    $region60: #{prescription_forward.1} parent=1 // pred_region
      %109 = dma.done [#allocation8], 16
    $region61: #{prescription_forward.1} parent=1 // pred_fallthru
      _
    // Predicated region
    $region62: #{prescription_forward.1} parent=1 // pred_check
      _
    $region63: #{prescription_forward.1} parent=1 // pred_check_branch
      %111 = sbr.rel (0) target = $region65
    $region64: #{prescription_forward.1} parent=1 // pred_region
      %112 = dma.done [#allocation11], 16
    $region65: #{prescription_forward.1} parent=1 // pred_fallthru
      _
    %v114 = vld [vmem:[%s0] sm:$0xff]
    %v115 = vlaneseq
    %v116 = vand.u32 %v115, 127
    %117 = vset.pattern.permute.xlu0 0
    %118 = vperm.xlu0 %117, %v114
    %v119 = vpop.permute.xlu0 %118
    %vm120 = vcmp.eq.s32.totalorder %v119, %v116
    %v121 = vsel %vm120, 1.0, 0.0
    %v122 = vadd.f32 %v121, 0.0
    %123 = vset.pattern.permute.xlu0 1
    %124 = vperm.xlu0 %123, %v114
    %v125 = vpop.permute.xlu0 %124
    %vm126 = vcmp.eq.s32.totalorder %v125, %v116
    %v127 = vsel %vm126, 1.0, 0.0
    %v128 = vadd.f32 %v122, %v127
    %129 = vset.pattern.permute.xlu0 2
    %130 = vperm.xlu0 %129, %v114
    %v131 = vpop.permute.xlu0 %130
    %vm132 = vcmp.eq.s32.totalorder %v131, %v116
    %v133 = vsel %vm132, 1.0, 0.0
    %v134 = vadd.f32 %v128, %v133
    %135 = vset.pattern.permute.xlu0 3
    %136 = vperm.xlu0 %135, %v114
    %v137 = vpop.permute.xlu0 %136
    %vm138 = vcmp.eq.s32.totalorder %v137, %v116
    %v139 = vsel %vm138, 1.0, 0.0
    %v140 = vadd.f32 %v134, %v139
    %141 = vset.pattern.permute.xlu0 4
    %142 = vperm.xlu0 %141, %v114
    %v143 = vpop.permute.xlu0 %142
    %vm144 = vcmp.eq.s32.totalorder %v143, %v116
    %v145 = vsel %vm144, 1.0, 0.0
    %v146 = vadd.f32 %v140, %v145
    %147 = vset.pattern.permute.xlu0 5
    %148 = vperm.xlu0 %147, %v114
    %v149 = vpop.permute.xlu0 %148
    %vm150 = vcmp.eq.s32.totalorder %v149, %v116
    %v151 = vsel %vm150, 1.0, 0.0
    %v152 = vadd.f32 %v146, %v151
    %v153 = vld [vmem:[#allocation2] sm:$0xff]
    %v154 = vld [vmem:[#allocation2 + $0x8] sm:$0xff]
    %v155 = vld [vmem:[#allocation2 + $0x10] sm:$0xff]
    %v156 = vld [vmem:[#allocation2 + $0x18] sm:$0xff]
    %v157 = vld [vmem:[#allocation2 + $0x20] sm:$0xff]
    %v158 = vld [vmem:[#allocation2 + $0x28] sm:$0xff]
    %v159 = vld [vmem:[#allocation2 + $0x30] sm:$0xff]
    %v160 = vld [vmem:[#allocation2 + $0x38] sm:$0xff]
    %v161 = vld [vmem:[#allocation2 + $0x40] sm:$0xff]
    %v162 = vld [vmem:[#allocation2 + $0x48] sm:$0xff]
    %v163 = vld [vmem:[#allocation2 + $0x50] sm:$0xff]
    %v164 = vld [vmem:[#allocation2 + $0x58] sm:$0xff]
    %v165 = vld [vmem:[#allocation2 + $0x60] sm:$0xff]
    %v166 = vld [vmem:[#allocation2 + $0x68] sm:$0xff]
    %v167 = vld [vmem:[#allocation2 + $0x70] sm:$0xff]
    %v168 = vld [vmem:[#allocation2 + $0x78] sm:$0xff]
    %169 = vmatprep.subr.mxu0 0.0
    %v170 = vand.u32 %v168, 4294901760
    %171 = vmatpush1.msra.mxu0 %v170
    %172 = vmatprep.subr.mxu0 0.0
    %v173 = vand.u32 %v167, 4294901760
    %174 = vmatpush1.msra.mxu0 %v173
    %175 = vmatprep.subr.mxu0 0.0
    %v176 = vand.u32 %v166, 4294901760
    %177 = vmatpush1.msra.mxu0 %v176
    %178 = vmatprep.subr.mxu0 0.0
    %v179 = vand.u32 %v165, 4294901760
    %180 = vmatpush1.msra.mxu0 %v179
    %181 = vmatprep.subr.mxu0 0.0
    %v182 = vand.u32 %v164, 4294901760
    %183 = vmatpush1.msra.mxu0 %v182
    %184 = vmatprep.subr.mxu0 0.0
    %v185 = vand.u32 %v163, 4294901760
    %186 = vmatpush1.msra.mxu0 %v185
    %187 = vmatprep.subr.mxu0 0.0
    %v188 = vand.u32 %v162, 4294901760
    %189 = vmatpush1.msra.mxu0 %v188
    %190 = vmatprep.subr.mxu0 0.0
    %v191 = vand.u32 %v161, 4294901760
    %192 = vmatpush1.msra.mxu0 %v191
    %193 = vmatprep.subr.mxu0 0.0
    %v194 = vand.u32 %v160, 4294901760
    %195 = vmatpush1.msra.mxu0 %v194
    %196 = vmatprep.subr.mxu0 0.0
    %v197 = vand.u32 %v159, 4294901760
    %198 = vmatpush1.msra.mxu0 %v197
    %199 = vmatprep.subr.mxu0 0.0
    %v200 = vand.u32 %v158, 4294901760
    %201 = vmatpush1.msra.mxu0 %v200
    %202 = vmatprep.subr.mxu0 0.0
    %v203 = vand.u32 %v157, 4294901760
    %204 = vmatpush1.msra.mxu0 %v203
    %205 = vmatprep.subr.mxu0 0.0
    %v206 = vand.u32 %v156, 4294901760
    %207 = vmatpush1.msra.mxu0 %v206
    %208 = vmatprep.subr.mxu0 0.0
    %v209 = vand.u32 %v155, 4294901760
    %210 = vmatpush1.msra.mxu0 %v209
    %211 = vmatprep.subr.mxu0 0.0
    %v212 = vand.u32 %v154, 4294901760
    %213 = vmatpush1.msra.mxu0 %v212
    %214 = vmatprep.subr.mxu0 0.0
    %v215 = vand.u32 %v153, 4294901760
    %216 = vmatpush1.msra.mxu0 %v215
    %217 = vmatprep.subr.mxu0 0.0
    %218 = vmatpush2.msra.mxu0 0.0
    %219 = vmatprep.subr.mxu0 0.0
    %220 = vmatpush2.msra.mxu0 0.0
    %221 = vmatprep.subr.mxu0 0.0
    %222 = vmatpush2.msra.mxu0 0.0
    %223 = vmatprep.subr.mxu0 0.0
    %224 = vmatpush2.msra.mxu0 0.0
    %225 = vmatprep.subr.mxu0 0.0
    %226 = vmatpush2.msra.mxu0 0.0
    %227 = vmatprep.subr.mxu0 0.0
    %228 = vmatpush2.msra.mxu0 0.0
    %229 = vmatprep.subr.mxu0 0.0
    %230 = vmatpush2.msra.mxu0 0.0
    %231 = vmatprep.subr.mxu0 0.0
    %232 = vmatpush2.msra.mxu0 0.0
    %233 = vmatprep.subr.mxu0 0.0
    %234 = vmatpush2.msra.mxu0 0.0
    %235 = vmatprep.subr.mxu0 0.0
    %236 = vmatpush2.msra.mxu0 0.0
    %237 = vmatprep.subr.mxu0 0.0
    %238 = vmatpush2.msra.mxu0 0.0
    %239 = vmatprep.subr.mxu0 0.0
    %240 = vmatpush2.msra.mxu0 0.0
    %241 = vmatprep.subr.mxu0 0.0
    %242 = vmatpush2.msra.mxu0 0.0
    %243 = vmatprep.subr.mxu0 0.0
    %244 = vmatpush2.msra.mxu0 0.0
    %245 = vmatprep.subr.mxu0 0.0
    %246 = vmatpush2.msra.mxu0 0.0
    %247 = vmatprep.subr.mxu0 0.0
    %248 = vmatpush2.msra.mxu0 0.0
    %249 = vmatprep.mubr.f32.mxu0 0.0
    %v250 = vand.u32 %v152, 4294901760
    %v251 = vsub.f32 %v152, %v250
    %v252 = vand.u32 %v251, 4294901760
    %v253 = vsub.f32 %v251, %v252
    %v254 = vand.u32 %v253, 4294901760
    %255 = vmatmul.mubr.f32.gmra.mxu0 %v254
    %v256 = vpop.f32.mrf.mxu0
    %v257 = vadd.f32 0.0, %v256
    %v258 = vpop.f32.mrf.mxu0
    %259 = vdwg.mxu0
    %260 = vmatprep.subr.mxu0 0.0
    %v261 = vand.u32 %v168, 4294901760
    %v262 = vsub.f32 %v168, %v261
    %v263 = vand.u32 %v262, 4294901760
    %v264 = vsub.f32 %v262, %v263
    %v265 = vand.u32 %v264, 4294901760
    %266 = vmatpush1.msra.mxu0 %v265
    %267 = vmatprep.subr.mxu0 0.0
    %v268 = vand.u32 %v167, 4294901760
    %v269 = vsub.f32 %v167, %v268
    %v270 = vand.u32 %v269, 4294901760
    %v271 = vsub.f32 %v269, %v270
    %v272 = vand.u32 %v271, 4294901760
    %273 = vmatpush1.msra.mxu0 %v272
    %274 = vmatprep.subr.mxu0 0.0
    %v275 = vand.u32 %v166, 4294901760
    %v276 = vsub.f32 %v166, %v275
    %v277 = vand.u32 %v276, 4294901760
    %v278 = vsub.f32 %v276, %v277
    %v279 = vand.u32 %v278, 4294901760
    %280 = vmatpush1.msra.mxu0 %v279
    %281 = vmatprep.subr.mxu0 0.0
    %v282 = vand.u32 %v165, 4294901760
    %v283 = vsub.f32 %v165, %v282
    %v284 = vand.u32 %v283, 4294901760
    %v285 = vsub.f32 %v283, %v284
    %v286 = vand.u32 %v285, 4294901760
    %287 = vmatpush1.msra.mxu0 %v286
    %288 = vmatprep.subr.mxu0 0.0
    %v289 = vand.u32 %v164, 4294901760
    %v290 = vsub.f32 %v164, %v289
    %v291 = vand.u32 %v290, 4294901760
    %v292 = vsub.f32 %v290, %v291
    %v293 = vand.u32 %v292, 4294901760
    %294 = vmatpush1.msra.mxu0 %v293
    %295 = vmatprep.subr.mxu0 0.0
    %v296 = vand.u32 %v163, 4294901760
    %v297 = vsub.f32 %v163, %v296
    %v298 = vand.u32 %v297, 4294901760
    %v299 = vsub.f32 %v297, %v298
    %v300 = vand.u32 %v299, 4294901760
    %301 = vmatpush1.msra.mxu0 %v300
    %302 = vmatprep.subr.mxu0 0.0
    %v303 = vand.u32 %v162, 4294901760
    %v304 = vsub.f32 %v162, %v303
    %v305 = vand.u32 %v304, 4294901760
    %v306 = vsub.f32 %v304, %v305
    %v307 = vand.u32 %v306, 4294901760
    %308 = vmatpush1.msra.mxu0 %v307
    %309 = vmatprep.subr.mxu0 0.0
    %v310 = vand.u32 %v161, 4294901760
    %v311 = vsub.f32 %v161, %v310
    %v312 = vand.u32 %v311, 4294901760
    %v313 = vsub.f32 %v311, %v312
    %v314 = vand.u32 %v313, 4294901760
    %315 = vmatpush1.msra.mxu0 %v314
    %316 = vmatprep.subr.mxu0 0.0
    %v317 = vand.u32 %v160, 4294901760
    %v318 = vsub.f32 %v160, %v317
    %v319 = vand.u32 %v318, 4294901760
    %v320 = vsub.f32 %v318, %v319
    %v321 = vand.u32 %v320, 4294901760
    %322 = vmatpush1.msra.mxu0 %v321
    %323 = vmatprep.subr.mxu0 0.0
    %v324 = vand.u32 %v159, 4294901760
    %v325 = vsub.f32 %v159, %v324
    %v326 = vand.u32 %v325, 4294901760
    %v327 = vsub.f32 %v325, %v326
    %v328 = vand.u32 %v327, 4294901760
    %329 = vmatpush1.msra.mxu0 %v328
    %330 = vmatprep.subr.mxu0 0.0
    %v331 = vand.u32 %v158, 4294901760
    %v332 = vsub.f32 %v158, %v331
    %v333 = vand.u32 %v332, 4294901760
    %v334 = vsub.f32 %v332, %v333
    %v335 = vand.u32 %v334, 4294901760
    %336 = vmatpush1.msra.mxu0 %v335
    %337 = vmatprep.subr.mxu0 0.0
    %v338 = vand.u32 %v157, 4294901760
    %v339 = vsub.f32 %v157, %v338
    %v340 = vand.u32 %v339, 4294901760
    %v341 = vsub.f32 %v339, %v340
    %v342 = vand.u32 %v341, 4294901760
    %343 = vmatpush1.msra.mxu0 %v342
    %344 = vmatprep.subr.mxu0 0.0
    %v345 = vand.u32 %v156, 4294901760
    %v346 = vsub.f32 %v156, %v345
    %v347 = vand.u32 %v346, 4294901760
    %v348 = vsub.f32 %v346, %v347
    %v349 = vand.u32 %v348, 4294901760
    %350 = vmatpush1.msra.mxu0 %v349
    %351 = vmatprep.subr.mxu0 0.0
    %v352 = vand.u32 %v155, 4294901760
    %v353 = vsub.f32 %v155, %v352
    %v354 = vand.u32 %v353, 4294901760
    %v355 = vsub.f32 %v353, %v354
    %v356 = vand.u32 %v355, 4294901760
    %357 = vmatpush1.msra.mxu0 %v356
    %358 = vmatprep.subr.mxu0 0.0
    %v359 = vand.u32 %v154, 4294901760
    %v360 = vsub.f32 %v154, %v359
    %v361 = vand.u32 %v360, 4294901760
    %v362 = vsub.f32 %v360, %v361
    %v363 = vand.u32 %v362, 4294901760
    %364 = vmatpush1.msra.mxu0 %v363
    %365 = vmatprep.subr.mxu0 0.0
    %v366 = vand.u32 %v153, 4294901760
    %v367 = vsub.f32 %v153, %v366
    %v368 = vand.u32 %v367, 4294901760
    %v369 = vsub.f32 %v367, %v368
    %v370 = vand.u32 %v369, 4294901760
    %371 = vmatpush1.msra.mxu0 %v370
    %372 = vmatprep.subr.mxu0 0.0
    %373 = vmatpush2.msra.mxu0 0.0
    %374 = vmatprep.subr.mxu0 0.0
    %375 = vmatpush2.msra.mxu0 0.0
    %376 = vmatprep.subr.mxu0 0.0
    %377 = vmatpush2.msra.mxu0 0.0
    %378 = vmatprep.subr.mxu0 0.0
    %379 = vmatpush2.msra.mxu0 0.0
    %380 = vmatprep.subr.mxu0 0.0
    %381 = vmatpush2.msra.mxu0 0.0
    %382 = vmatprep.subr.mxu0 0.0
    %383 = vmatpush2.msra.mxu0 0.0
    %384 = vmatprep.subr.mxu0 0.0
    %385 = vmatpush2.msra.mxu0 0.0
    %386 = vmatprep.subr.mxu0 0.0
    %387 = vmatpush2.msra.mxu0 0.0
    %388 = vmatprep.subr.mxu0 0.0
    %389 = vmatpush2.msra.mxu0 0.0
    %390 = vmatprep.subr.mxu0 0.0
    %391 = vmatpush2.msra.mxu0 0.0
    %392 = vmatprep.subr.mxu0 0.0
    %393 = vmatpush2.msra.mxu0 0.0
    %394 = vmatprep.subr.mxu0 0.0
    %395 = vmatpush2.msra.mxu0 0.0
    %396 = vmatprep.subr.mxu0 0.0
    %397 = vmatpush2.msra.mxu0 0.0
    %398 = vmatprep.subr.mxu0 0.0
    %399 = vmatpush2.msra.mxu0 0.0
    %400 = vmatprep.subr.mxu0 0.0
    %401 = vmatpush2.msra.mxu0 0.0
    %402 = vmatprep.subr.mxu0 0.0
    %403 = vmatpush2.msra.mxu0 0.0
    %404 = vmatprep.mubr.f32.mxu0 0.0
    %v405 = vand.u32 %v152, 4294901760
    %406 = vmatmul.mubr.f32.gmra.mxu0 %v405
    %v407 = vpop.f32.mrf.mxu0
    %v408 = vadd.f32 %v257, %v407
    %v409 = vpop.f32.mrf.mxu0
    %410 = vdwg.mxu0
    %411 = vmatprep.subr.mxu0 0.0
    %v412 = vand.u32 %v168, 4294901760
    %v413 = vsub.f32 %v168, %v412
    %414 = vmatpush1.msra.mxu0 %v413
    %415 = vmatprep.subr.mxu0 0.0
    %v416 = vand.u32 %v167, 4294901760
    %v417 = vsub.f32 %v167, %v416
    %418 = vmatpush1.msra.mxu0 %v417
    %419 = vmatprep.subr.mxu0 0.0
    %v420 = vand.u32 %v166, 4294901760
    %v421 = vsub.f32 %v166, %v420
    %422 = vmatpush1.msra.mxu0 %v421
    %423 = vmatprep.subr.mxu0 0.0
    %v424 = vand.u32 %v165, 4294901760
    %v425 = vsub.f32 %v165, %v424
    %426 = vmatpush1.msra.mxu0 %v425
    %427 = vmatprep.subr.mxu0 0.0
    %v428 = vand.u32 %v164, 4294901760
    %v429 = vsub.f32 %v164, %v428
    %430 = vmatpush1.msra.mxu0 %v429
    %431 = vmatprep.subr.mxu0 0.0
    %v432 = vand.u32 %v163, 4294901760
    %v433 = vsub.f32 %v163, %v432
    %434 = vmatpush1.msra.mxu0 %v433
    %435 = vmatprep.subr.mxu0 0.0
    %v436 = vand.u32 %v162, 4294901760
    %v437 = vsub.f32 %v162, %v436
    %438 = vmatpush1.msra.mxu0 %v437
    %439 = vmatprep.subr.mxu0 0.0
    %v440 = vand.u32 %v161, 4294901760
    %v441 = vsub.f32 %v161, %v440
    %442 = vmatpush1.msra.mxu0 %v441
    %443 = vmatprep.subr.mxu0 0.0
    %v444 = vand.u32 %v160, 4294901760
    %v445 = vsub.f32 %v160, %v444
    %446 = vmatpush1.msra.mxu0 %v445
    %447 = vmatprep.subr.mxu0 0.0
    %v448 = vand.u32 %v159, 4294901760
    %v449 = vsub.f32 %v159, %v448
    %450 = vmatpush1.msra.mxu0 %v449
    %451 = vmatprep.subr.mxu0 0.0
    %v452 = vand.u32 %v158, 4294901760
    %v453 = vsub.f32 %v158, %v452
    %454 = vmatpush1.msra.mxu0 %v453
    %455 = vmatprep.subr.mxu0 0.0
    %v456 = vand.u32 %v157, 4294901760
    %v457 = vsub.f32 %v157, %v456
    %458 = vmatpush1.msra.mxu0 %v457
    %459 = vmatprep.subr.mxu0 0.0
    %v460 = vand.u32 %v156, 4294901760
    %v461 = vsub.f32 %v156, %v460
    %462 = vmatpush1.msra.mxu0 %v461
    %463 = vmatprep.subr.mxu0 0.0
    %v464 = vand.u32 %v155, 4294901760
    %v465 = vsub.f32 %v155, %v464
    %466 = vmatpush1.msra.mxu0 %v465
    %467 = vmatprep.subr.mxu0 0.0
    %v468 = vand.u32 %v154, 4294901760
    %v469 = vsub.f32 %v154, %v468
    %470 = vmatpush1.msra.mxu0 %v469
    %471 = vmatprep.subr.mxu0 0.0
    %v472 = vand.u32 %v153, 4294901760
    %v473 = vsub.f32 %v153, %v472
    %474 = vmatpush1.msra.mxu0 %v473
    %475 = vmatprep.subr.mxu0 0.0
    %476 = vmatpush2.msra.mxu0 0.0
    %477 = vmatprep.subr.mxu0 0.0
    %478 = vmatpush2.msra.mxu0 0.0
    %479 = vmatprep.subr.mxu0 0.0
    %480 = vmatpush2.msra.mxu0 0.0
    %481 = vmatprep.subr.mxu0 0.0
    %482 = vmatpush2.msra.mxu0 0.0
    %483 = vmatprep.subr.mxu0 0.0
    %484 = vmatpush2.msra.mxu0 0.0
    %485 = vmatprep.subr.mxu0 0.0
    %486 = vmatpush2.msra.mxu0 0.0
    %487 = vmatprep.subr.mxu0 0.0
    %488 = vmatpush2.msra.mxu0 0.0
    %489 = vmatprep.subr.mxu0 0.0
    %490 = vmatpush2.msra.mxu0 0.0
    %491 = vmatprep.subr.mxu0 0.0
    %492 = vmatpush2.msra.mxu0 0.0
    %493 = vmatprep.subr.mxu0 0.0
    %494 = vmatpush2.msra.mxu0 0.0
    %495 = vmatprep.subr.mxu0 0.0
    %496 = vmatpush2.msra.mxu0 0.0
    %497 = vmatprep.subr.mxu0 0.0
    %498 = vmatpush2.msra.mxu0 0.0
    %499 = vmatprep.subr.mxu0 0.0
    %500 = vmatpush2.msra.mxu0 0.0
    %501 = vmatprep.subr.mxu0 0.0
    %502 = vmatpush2.msra.mxu0 0.0
    %503 = vmatprep.subr.mxu0 0.0
    %504 = vmatpush2.msra.mxu0 0.0
    %505 = vmatprep.subr.mxu0 0.0
    %506 = vmatpush2.msra.mxu0 0.0
    %507 = vmatprep.mubr.f32.mxu0 0.0
    %v508 = vand.u32 %v152, 4294901760
    %v509 = vsub.f32 %v152, %v508
    %510 = vmatmul.mubr.f32.gmra.mxu0 %v509
    %v511 = vpop.f32.mrf.mxu0
    %v512 = vadd.f32 %v408, %v511
    %v513 = vpop.f32.mrf.mxu0
    %514 = vdwg.mxu0
    %515 = vmatprep.subr.mxu0 0.0
    %v516 = vand.u32 %v168, 4294901760
    %517 = vmatpush1.msra.mxu0 %v516
    %518 = vmatprep.subr.mxu0 0.0
    %v519 = vand.u32 %v167, 4294901760
    %520 = vmatpush1.msra.mxu0 %v519
    %521 = vmatprep.subr.mxu0 0.0
    %v522 = vand.u32 %v166, 4294901760
    %523 = vmatpush1.msra.mxu0 %v522
    %524 = vmatprep.subr.mxu0 0.0
    %v525 = vand.u32 %v165, 4294901760
    %526 = vmatpush1.msra.mxu0 %v525
    %527 = vmatprep.subr.mxu0 0.0
    %v528 = vand.u32 %v164, 4294901760
    %529 = vmatpush1.msra.mxu0 %v528
    %530 = vmatprep.subr.mxu0 0.0
    %v531 = vand.u32 %v163, 4294901760
    %532 = vmatpush1.msra.mxu0 %v531
    %533 = vmatprep.subr.mxu0 0.0
    %v534 = vand.u32 %v162, 4294901760
    %535 = vmatpush1.msra.mxu0 %v534
    %536 = vmatprep.subr.mxu0 0.0
    %v537 = vand.u32 %v161, 4294901760
    %538 = vmatpush1.msra.mxu0 %v537
    %539 = vmatprep.subr.mxu0 0.0
    %v540 = vand.u32 %v160, 4294901760
    %541 = vmatpush1.msra.mxu0 %v540
    %542 = vmatprep.subr.mxu0 0.0
    %v543 = vand.u32 %v159, 4294901760
    %544 = vmatpush1.msra.mxu0 %v543
    %545 = vmatprep.subr.mxu0 0.0
    %v546 = vand.u32 %v158, 4294901760
    %547 = vmatpush1.msra.mxu0 %v546
    %548 = vmatprep.subr.mxu0 0.0
    %v549 = vand.u32 %v157, 4294901760
    %550 = vmatpush1.msra.mxu0 %v549
    %551 = vmatprep.subr.mxu0 0.0
    %v552 = vand.u32 %v156, 4294901760
    %553 = vmatpush1.msra.mxu0 %v552
    %554 = vmatprep.subr.mxu0 0.0
    %v555 = vand.u32 %v155, 4294901760
    %556 = vmatpush1.msra.mxu0 %v555
    %557 = vmatprep.subr.mxu0 0.0
    %v558 = vand.u32 %v154, 4294901760
    %559 = vmatpush1.msra.mxu0 %v558
    %560 = vmatprep.subr.mxu0 0.0
    %v561 = vand.u32 %v153, 4294901760
    %562 = vmatpush1.msra.mxu0 %v561
    %563 = vmatprep.subr.mxu0 0.0
    %564 = vmatpush2.msra.mxu0 0.0
    %565 = vmatprep.subr.mxu0 0.0
    %566 = vmatpush2.msra.mxu0 0.0
    %567 = vmatprep.subr.mxu0 0.0
    %568 = vmatpush2.msra.mxu0 0.0
    %569 = vmatprep.subr.mxu0 0.0
    %570 = vmatpush2.msra.mxu0 0.0
    %571 = vmatprep.subr.mxu0 0.0
    %572 = vmatpush2.msra.mxu0 0.0
    %573 = vmatprep.subr.mxu0 0.0
    %574 = vmatpush2.msra.mxu0 0.0
    %575 = vmatprep.subr.mxu0 0.0
    %576 = vmatpush2.msra.mxu0 0.0
    %577 = vmatprep.subr.mxu0 0.0
    %578 = vmatpush2.msra.mxu0 0.0
    %579 = vmatprep.subr.mxu0 0.0
    %580 = vmatpush2.msra.mxu0 0.0
    %581 = vmatprep.subr.mxu0 0.0
    %582 = vmatpush2.msra.mxu0 0.0
    %583 = vmatprep.subr.mxu0 0.0
    %584 = vmatpush2.msra.mxu0 0.0
    %585 = vmatprep.subr.mxu0 0.0
    %586 = vmatpush2.msra.mxu0 0.0
    %587 = vmatprep.subr.mxu0 0.0
    %588 = vmatpush2.msra.mxu0 0.0
    %589 = vmatprep.subr.mxu0 0.0
    %590 = vmatpush2.msra.mxu0 0.0
    %591 = vmatprep.subr.mxu0 0.0
    %592 = vmatpush2.msra.mxu0 0.0
    %593 = vmatprep.subr.mxu0 0.0
    %594 = vmatpush2.msra.mxu0 0.0
    %595 = vmatprep.mubr.f32.mxu0 0.0
    %v596 = vand.u32 %v152, 4294901760
    %v597 = vsub.f32 %v152, %v596
    %v598 = vand.u32 %v597, 4294901760
    %599 = vmatmul.mubr.f32.gmra.mxu0 %v598
    %v600 = vpop.f32.mrf.mxu0
    %v601 = vadd.f32 %v512, %v600
    %v602 = vpop.f32.mrf.mxu0
    %603 = vdwg.mxu0
    %604 = vmatprep.subr.mxu0 0.0
    %v605 = vand.u32 %v168, 4294901760
    %v606 = vsub.f32 %v168, %v605
    %v607 = vand.u32 %v606, 4294901760
    %608 = vmatpush1.msra.mxu0 %v607
    %609 = vmatprep.subr.mxu0 0.0
    %v610 = vand.u32 %v167, 4294901760
    %v611 = vsub.f32 %v167, %v610
    %v612 = vand.u32 %v611, 4294901760
    %613 = vmatpush1.msra.mxu0 %v612
    %614 = vmatprep.subr.mxu0 0.0
    %v615 = vand.u32 %v166, 4294901760
    %v616 = vsub.f32 %v166, %v615
    %v617 = vand.u32 %v616, 4294901760
    %618 = vmatpush1.msra.mxu0 %v617
    %619 = vmatprep.subr.mxu0 0.0
    %v620 = vand.u32 %v165, 4294901760
    %v621 = vsub.f32 %v165, %v620
    %v622 = vand.u32 %v621, 4294901760
    %623 = vmatpush1.msra.mxu0 %v622
    %624 = vmatprep.subr.mxu0 0.0
    %v625 = vand.u32 %v164, 4294901760
    %v626 = vsub.f32 %v164, %v625
    %v627 = vand.u32 %v626, 4294901760
    %628 = vmatpush1.msra.mxu0 %v627
    %629 = vmatprep.subr.mxu0 0.0
    %v630 = vand.u32 %v163, 4294901760
    %v631 = vsub.f32 %v163, %v630
    %v632 = vand.u32 %v631, 4294901760
    %633 = vmatpush1.msra.mxu0 %v632
    %634 = vmatprep.subr.mxu0 0.0
    %v635 = vand.u32 %v162, 4294901760
    %v636 = vsub.f32 %v162, %v635
    %v637 = vand.u32 %v636, 4294901760
    %638 = vmatpush1.msra.mxu0 %v637
    %639 = vmatprep.subr.mxu0 0.0
    %v640 = vand.u32 %v161, 4294901760
    %v641 = vsub.f32 %v161, %v640
    %v642 = vand.u32 %v641, 4294901760
    %643 = vmatpush1.msra.mxu0 %v642
    %644 = vmatprep.subr.mxu0 0.0
    %v645 = vand.u32 %v160, 4294901760
    %v646 = vsub.f32 %v160, %v645
    %v647 = vand.u32 %v646, 4294901760
    %648 = vmatpush1.msra.mxu0 %v647
    %649 = vmatprep.subr.mxu0 0.0
    %v650 = vand.u32 %v159, 4294901760
    %v651 = vsub.f32 %v159, %v650
    %v652 = vand.u32 %v651, 4294901760
    %653 = vmatpush1.msra.mxu0 %v652
    %654 = vmatprep.subr.mxu0 0.0
    %v655 = vand.u32 %v158, 4294901760
    %v656 = vsub.f32 %v158, %v655
    %v657 = vand.u32 %v656, 4294901760
    %658 = vmatpush1.msra.mxu0 %v657
    %659 = vmatprep.subr.mxu0 0.0
    %v660 = vand.u32 %v157, 4294901760
    %v661 = vsub.f32 %v157, %v660
    %v662 = vand.u32 %v661, 4294901760
    %663 = vmatpush1.msra.mxu0 %v662
    %664 = vmatprep.subr.mxu0 0.0
    %v665 = vand.u32 %v156, 4294901760
    %v666 = vsub.f32 %v156, %v665
    %v667 = vand.u32 %v666, 4294901760
    %668 = vmatpush1.msra.mxu0 %v667
    %669 = vmatprep.subr.mxu0 0.0
    %v670 = vand.u32 %v155, 4294901760
    %v671 = vsub.f32 %v155, %v670
    %v672 = vand.u32 %v671, 4294901760
    %673 = vmatpush1.msra.mxu0 %v672
    %674 = vmatprep.subr.mxu0 0.0
    %v675 = vand.u32 %v154, 4294901760
    %v676 = vsub.f32 %v154, %v675
    %v677 = vand.u32 %v676, 4294901760
    %678 = vmatpush1.msra.mxu0 %v677
    %679 = vmatprep.subr.mxu0 0.0
    %v680 = vand.u32 %v153, 4294901760
    %v681 = vsub.f32 %v153, %v680
    %v682 = vand.u32 %v681, 4294901760
    %683 = vmatpush1.msra.mxu0 %v682
    %684 = vmatprep.subr.mxu0 0.0
    %685 = vmatpush2.msra.mxu0 0.0
    %686 = vmatprep.subr.mxu0 0.0
    %687 = vmatpush2.msra.mxu0 0.0
    %688 = vmatprep.subr.mxu0 0.0
    %689 = vmatpush2.msra.mxu0 0.0
    %690 = vmatprep.subr.mxu0 0.0
    %691 = vmatpush2.msra.mxu0 0.0
    %692 = vmatprep.subr.mxu0 0.0
    %693 = vmatpush2.msra.mxu0 0.0
    %694 = vmatprep.subr.mxu0 0.0
    %695 = vmatpush2.msra.mxu0 0.0
    %696 = vmatprep.subr.mxu0 0.0
    %697 = vmatpush2.msra.mxu0 0.0
    %698 = vmatprep.subr.mxu0 0.0
    %699 = vmatpush2.msra.mxu0 0.0
    %700 = vmatprep.subr.mxu0 0.0
    %701 = vmatpush2.msra.mxu0 0.0
    %702 = vmatprep.subr.mxu0 0.0
    %703 = vmatpush2.msra.mxu0 0.0
    %704 = vmatprep.subr.mxu0 0.0
    %705 = vmatpush2.msra.mxu0 0.0
    %706 = vmatprep.subr.mxu0 0.0
    %707 = vmatpush2.msra.mxu0 0.0
    %708 = vmatprep.subr.mxu0 0.0
    %709 = vmatpush2.msra.mxu0 0.0
    %710 = vmatprep.subr.mxu0 0.0
    %711 = vmatpush2.msra.mxu0 0.0
    %712 = vmatprep.subr.mxu0 0.0
    %713 = vmatpush2.msra.mxu0 0.0
    %714 = vmatprep.subr.mxu0 0.0
    %715 = vmatpush2.msra.mxu0 0.0
    %716 = vmatprep.mubr.f32.mxu0 0.0
    %v717 = vand.u32 %v152, 4294901760
    %718 = vmatmul.mubr.f32.gmra.mxu0 %v717
    %v719 = vpop.f32.mrf.mxu0
    %v720 = vadd.f32 %v601, %v719
    %v721 = vpop.f32.mrf.mxu0
    %722 = vdwg.mxu0
    %723 = vmatprep.subr.mxu0 0.0
    %v724 = vand.u32 %v168, 4294901760
    %725 = vmatpush1.msra.mxu0 %v724
    %726 = vmatprep.subr.mxu0 0.0
    %v727 = vand.u32 %v167, 4294901760
    %728 = vmatpush1.msra.mxu0 %v727
    %729 = vmatprep.subr.mxu0 0.0
    %v730 = vand.u32 %v166, 4294901760
    %731 = vmatpush1.msra.mxu0 %v730
    %732 = vmatprep.subr.mxu0 0.0
    %v733 = vand.u32 %v165, 4294901760
    %734 = vmatpush1.msra.mxu0 %v733
    %735 = vmatprep.subr.mxu0 0.0
    %v736 = vand.u32 %v164, 4294901760
    %737 = vmatpush1.msra.mxu0 %v736
    %738 = vmatprep.subr.mxu0 0.0
    %v739 = vand.u32 %v163, 4294901760
    %740 = vmatpush1.msra.mxu0 %v739
    %741 = vmatprep.subr.mxu0 0.0
    %v742 = vand.u32 %v162, 4294901760
    %743 = vmatpush1.msra.mxu0 %v742
    %744 = vmatprep.subr.mxu0 0.0
    %v745 = vand.u32 %v161, 4294901760
    %746 = vmatpush1.msra.mxu0 %v745
    %747 = vmatprep.subr.mxu0 0.0
    %v748 = vand.u32 %v160, 4294901760
    %749 = vmatpush1.msra.mxu0 %v748
    %750 = vmatprep.subr.mxu0 0.0
    %v751 = vand.u32 %v159, 4294901760
    %752 = vmatpush1.msra.mxu0 %v751
    %753 = vmatprep.subr.mxu0 0.0
    %v754 = vand.u32 %v158, 4294901760
    %755 = vmatpush1.msra.mxu0 %v754
    %756 = vmatprep.subr.mxu0 0.0
    %v757 = vand.u32 %v157, 4294901760
    %758 = vmatpush1.msra.mxu0 %v757
    %759 = vmatprep.subr.mxu0 0.0
    %v760 = vand.u32 %v156, 4294901760
    %761 = vmatpush1.msra.mxu0 %v760
    %762 = vmatprep.subr.mxu0 0.0
    %v763 = vand.u32 %v155, 4294901760
    %764 = vmatpush1.msra.mxu0 %v763
    %765 = vmatprep.subr.mxu0 0.0
    %v766 = vand.u32 %v154, 4294901760
    %767 = vmatpush1.msra.mxu0 %v766
    %768 = vmatprep.subr.mxu0 0.0
    %v769 = vand.u32 %v153, 4294901760
    %770 = vmatpush1.msra.mxu0 %v769
    %771 = vmatprep.subr.mxu0 0.0
    %772 = vmatpush2.msra.mxu0 0.0
    %773 = vmatprep.subr.mxu0 0.0
    %774 = vmatpush2.msra.mxu0 0.0
    %775 = vmatprep.subr.mxu0 0.0
    %776 = vmatpush2.msra.mxu0 0.0
    %777 = vmatprep.subr.mxu0 0.0
    %778 = vmatpush2.msra.mxu0 0.0
    %779 = vmatprep.subr.mxu0 0.0
    %780 = vmatpush2.msra.mxu0 0.0
    %781 = vmatprep.subr.mxu0 0.0
    %782 = vmatpush2.msra.mxu0 0.0
    %783 = vmatprep.subr.mxu0 0.0
    %784 = vmatpush2.msra.mxu0 0.0
    %785 = vmatprep.subr.mxu0 0.0
    %786 = vmatpush2.msra.mxu0 0.0
    %787 = vmatprep.subr.mxu0 0.0
    %788 = vmatpush2.msra.mxu0 0.0
    %789 = vmatprep.subr.mxu0 0.0
    %790 = vmatpush2.msra.mxu0 0.0
    %791 = vmatprep.subr.mxu0 0.0
    %792 = vmatpush2.msra.mxu0 0.0
    %793 = vmatprep.subr.mxu0 0.0
    %794 = vmatpush2.msra.mxu0 0.0
    %795 = vmatprep.subr.mxu0 0.0
    %796 = vmatpush2.msra.mxu0 0.0
    %797 = vmatprep.subr.mxu0 0.0
    %798 = vmatpush2.msra.mxu0 0.0
    %799 = vmatprep.subr.mxu0 0.0
    %800 = vmatpush2.msra.mxu0 0.0
    %801 = vmatprep.subr.mxu0 0.0
    %802 = vmatpush2.msra.mxu0 0.0
    %803 = vmatprep.mubr.f32.mxu0 0.0
    %v804 = vand.u32 %v152, 4294901760
    %805 = vmatmul.mubr.f32.gmra.mxu0 %v804
    %v806 = vpop.f32.mrf.mxu0
    %v807 = vadd.f32 %v720, %v806
    %v808 = vpop.f32.mrf.mxu0
    %809 = vdwg.mxu0
    %v810 = vld [vmem:[%s1] sm:$0xff]
    %811 = vset.pattern.permute.xlu0 0
    %812 = vperm.xlu0 %811, %v810
    %v813 = vpop.permute.xlu0 %812
    %vm814 = vcmp.eq.s32.totalorder %v813, %v116
    %v815 = vsel %vm814, 1.0, 0.0
    %v816 = vadd.f32 %v815, 0.0
    %817 = vset.pattern.permute.xlu0 1
    %818 = vperm.xlu0 %817, %v810
    %v819 = vpop.permute.xlu0 %818
    %vm820 = vcmp.eq.s32.totalorder %v819, %v116
    %v821 = vsel %vm820, 1.0, 0.0
    %v822 = vadd.f32 %v816, %v821
    %823 = vset.pattern.permute.xlu0 2
    %824 = vperm.xlu0 %823, %v810
    %v825 = vpop.permute.xlu0 %824
    %vm826 = vcmp.eq.s32.totalorder %v825, %v116
    %v827 = vsel %vm826, 1.0, 0.0
    %v828 = vadd.f32 %v822, %v827
    %829 = vset.pattern.permute.xlu0 3
    %830 = vperm.xlu0 %829, %v810
    %v831 = vpop.permute.xlu0 %830
    %vm832 = vcmp.eq.s32.totalorder %v831, %v116
    %v833 = vsel %vm832, 1.0, 0.0
    %v834 = vadd.f32 %v828, %v833
    %835 = vset.pattern.permute.xlu0 4
    %836 = vperm.xlu0 %835, %v810
    %v837 = vpop.permute.xlu0 %836
    %vm838 = vcmp.eq.s32.totalorder %v837, %v116
    %v839 = vsel %vm838, 1.0, 0.0
    %v840 = vadd.f32 %v834, %v839
    %841 = vset.pattern.permute.xlu0 5
    %842 = vperm.xlu0 %841, %v810
    %v843 = vpop.permute.xlu0 %842
    %vm844 = vcmp.eq.s32.totalorder %v843, %v116
    %v845 = vsel %vm844, 1.0, 0.0
    %v846 = vadd.f32 %v840, %v845
    %v847 = vld [vmem:[#allocation4] sm:$0xff]
    %v848 = vld [vmem:[#allocation4 + $0x8] sm:$0xff]
    %v849 = vld [vmem:[#allocation4 + $0x10] sm:$0xff]
    %v850 = vld [vmem:[#allocation4 + $0x18] sm:$0xff]
    %v851 = vld [vmem:[#allocation4 + $0x20] sm:$0xff]
    %v852 = vld [vmem:[#allocation4 + $0x28] sm:$0xff]
    %v853 = vld [vmem:[#allocation4 + $0x30] sm:$0xff]
    %v854 = vld [vmem:[#allocation4 + $0x38] sm:$0xff]
    %v855 = vld [vmem:[#allocation4 + $0x40] sm:$0xff]
    %v856 = vld [vmem:[#allocation4 + $0x48] sm:$0xff]
    %v857 = vld [vmem:[#allocation4 + $0x50] sm:$0xff]
    %v858 = vld [vmem:[#allocation4 + $0x58] sm:$0xff]
    %v859 = vld [vmem:[#allocation4 + $0x60] sm:$0xff]
    %v860 = vld [vmem:[#allocation4 + $0x68] sm:$0xff]
    %v861 = vld [vmem:[#allocation4 + $0x70] sm:$0xff]
    %v862 = vld [vmem:[#allocation4 + $0x78] sm:$0xff]
    %863 = vmatprep.subr.mxu0 0.0
    %v864 = vand.u32 %v862, 4294901760
    %865 = vmatpush1.msra.mxu0 %v864
    %866 = vmatprep.subr.mxu0 0.0
    %v867 = vand.u32 %v861, 4294901760
    %868 = vmatpush1.msra.mxu0 %v867
    %869 = vmatprep.subr.mxu0 0.0
    %v870 = vand.u32 %v860, 4294901760
    %871 = vmatpush1.msra.mxu0 %v870
    %872 = vmatprep.subr.mxu0 0.0
    %v873 = vand.u32 %v859, 4294901760
    %874 = vmatpush1.msra.mxu0 %v873
    %875 = vmatprep.subr.mxu0 0.0
    %v876 = vand.u32 %v858, 4294901760
    %877 = vmatpush1.msra.mxu0 %v876
    %878 = vmatprep.subr.mxu0 0.0
    %v879 = vand.u32 %v857, 4294901760
    %880 = vmatpush1.msra.mxu0 %v879
    %881 = vmatprep.subr.mxu0 0.0
    %v882 = vand.u32 %v856, 4294901760
    %883 = vmatpush1.msra.mxu0 %v882
    %884 = vmatprep.subr.mxu0 0.0
    %v885 = vand.u32 %v855, 4294901760
    %886 = vmatpush1.msra.mxu0 %v885
    %887 = vmatprep.subr.mxu0 0.0
    %v888 = vand.u32 %v854, 4294901760
    %889 = vmatpush1.msra.mxu0 %v888
    %890 = vmatprep.subr.mxu0 0.0
    %v891 = vand.u32 %v853, 4294901760
    %892 = vmatpush1.msra.mxu0 %v891
    %893 = vmatprep.subr.mxu0 0.0
    %v894 = vand.u32 %v852, 4294901760
    %895 = vmatpush1.msra.mxu0 %v894
    %896 = vmatprep.subr.mxu0 0.0
    %v897 = vand.u32 %v851, 4294901760
    %898 = vmatpush1.msra.mxu0 %v897
    %899 = vmatprep.subr.mxu0 0.0
    %v900 = vand.u32 %v850, 4294901760
    %901 = vmatpush1.msra.mxu0 %v900
    %902 = vmatprep.subr.mxu0 0.0
    %v903 = vand.u32 %v849, 4294901760
    %904 = vmatpush1.msra.mxu0 %v903
    %905 = vmatprep.subr.mxu0 0.0
    %v906 = vand.u32 %v848, 4294901760
    %907 = vmatpush1.msra.mxu0 %v906
    %908 = vmatprep.subr.mxu0 0.0
    %v909 = vand.u32 %v847, 4294901760
    %910 = vmatpush1.msra.mxu0 %v909
    %911 = vmatprep.subr.mxu0 0.0
    %912 = vmatpush2.msra.mxu0 0.0
    %913 = vmatprep.subr.mxu0 0.0
    %914 = vmatpush2.msra.mxu0 0.0
    %915 = vmatprep.subr.mxu0 0.0
    %916 = vmatpush2.msra.mxu0 0.0
    %917 = vmatprep.subr.mxu0 0.0
    %918 = vmatpush2.msra.mxu0 0.0
    %919 = vmatprep.subr.mxu0 0.0
    %920 = vmatpush2.msra.mxu0 0.0
    %921 = vmatprep.subr.mxu0 0.0
    %922 = vmatpush2.msra.mxu0 0.0
    %923 = vmatprep.subr.mxu0 0.0
    %924 = vmatpush2.msra.mxu0 0.0
    %925 = vmatprep.subr.mxu0 0.0
    %926 = vmatpush2.msra.mxu0 0.0
    %927 = vmatprep.subr.mxu0 0.0
    %928 = vmatpush2.msra.mxu0 0.0
    %929 = vmatprep.subr.mxu0 0.0
    %930 = vmatpush2.msra.mxu0 0.0
    %931 = vmatprep.subr.mxu0 0.0
    %932 = vmatpush2.msra.mxu0 0.0
    %933 = vmatprep.subr.mxu0 0.0
    %934 = vmatpush2.msra.mxu0 0.0
    %935 = vmatprep.subr.mxu0 0.0
    %936 = vmatpush2.msra.mxu0 0.0
    %937 = vmatprep.subr.mxu0 0.0
    %938 = vmatpush2.msra.mxu0 0.0
    %939 = vmatprep.subr.mxu0 0.0
    %940 = vmatpush2.msra.mxu0 0.0
    %941 = vmatprep.subr.mxu0 0.0
    %942 = vmatpush2.msra.mxu0 0.0
    %943 = vmatprep.mubr.f32.mxu0 0.0
    %v944 = vand.u32 %v846, 4294901760
    %v945 = vsub.f32 %v846, %v944
    %v946 = vand.u32 %v945, 4294901760
    %v947 = vsub.f32 %v945, %v946
    %v948 = vand.u32 %v947, 4294901760
    %949 = vmatmul.mubr.f32.gmra.mxu0 %v948
    %v950 = vpop.f32.mrf.mxu0
    %v951 = vadd.f32 0.0, %v950
    %v952 = vpop.f32.mrf.mxu0
    %953 = vdwg.mxu0
    %954 = vmatprep.subr.mxu0 0.0
    %v955 = vand.u32 %v862, 4294901760
    %v956 = vsub.f32 %v862, %v955
    %v957 = vand.u32 %v956, 4294901760
    %v958 = vsub.f32 %v956, %v957
    %v959 = vand.u32 %v958, 4294901760
    %960 = vmatpush1.msra.mxu0 %v959
    %961 = vmatprep.subr.mxu0 0.0
    %v962 = vand.u32 %v861, 4294901760
    %v963 = vsub.f32 %v861, %v962
    %v964 = vand.u32 %v963, 4294901760
    %v965 = vsub.f32 %v963, %v964
    %v966 = vand.u32 %v965, 4294901760
    %967 = vmatpush1.msra.mxu0 %v966
    %968 = vmatprep.subr.mxu0 0.0
    %v969 = vand.u32 %v860, 4294901760
    %v970 = vsub.f32 %v860, %v969
    %v971 = vand.u32 %v970, 4294901760
    %v972 = vsub.f32 %v970, %v971
    %v973 = vand.u32 %v972, 4294901760
    %974 = vmatpush1.msra.mxu0 %v973
    %975 = vmatprep.subr.mxu0 0.0
    %v976 = vand.u32 %v859, 4294901760
    %v977 = vsub.f32 %v859, %v976
    %v978 = vand.u32 %v977, 4294901760
    %v979 = vsub.f32 %v977, %v978
    %v980 = vand.u32 %v979, 4294901760
    %981 = vmatpush1.msra.mxu0 %v980
    %982 = vmatprep.subr.mxu0 0.0
    %v983 = vand.u32 %v858, 4294901760
    %v984 = vsub.f32 %v858, %v983
    %v985 = vand.u32 %v984, 4294901760
    %v986 = vsub.f32 %v984, %v985
    %v987 = vand.u32 %v986, 4294901760
    %988 = vmatpush1.msra.mxu0 %v987
    %989 = vmatprep.subr.mxu0 0.0
    %v990 = vand.u32 %v857, 4294901760
    %v991 = vsub.f32 %v857, %v990
    %v992 = vand.u32 %v991, 4294901760
    %v993 = vsub.f32 %v991, %v992
    %v994 = vand.u32 %v993, 4294901760
    %995 = vmatpush1.msra.mxu0 %v994
    %996 = vmatprep.subr.mxu0 0.0
    %v997 = vand.u32 %v856, 4294901760
    %v998 = vsub.f32 %v856, %v997
    %v999 = vand.u32 %v998, 4294901760
    %v1000 = vsub.f32 %v998, %v999
    %v1001 = vand.u32 %v1000, 4294901760
    %1002 = vmatpush1.msra.mxu0 %v1001
    %1003 = vmatprep.subr.mxu0 0.0
    %v1004 = vand.u32 %v855, 4294901760
    %v1005 = vsub.f32 %v855, %v1004
    %v1006 = vand.u32 %v1005, 4294901760
    %v1007 = vsub.f32 %v1005, %v1006
    %v1008 = vand.u32 %v1007, 4294901760
    %1009 = vmatpush1.msra.mxu0 %v1008
    %1010 = vmatprep.subr.mxu0 0.0
    %v1011 = vand.u32 %v854, 4294901760
    %v1012 = vsub.f32 %v854, %v1011
    %v1013 = vand.u32 %v1012, 4294901760
    %v1014 = vsub.f32 %v1012, %v1013
    %v1015 = vand.u32 %v1014, 4294901760
    %1016 = vmatpush1.msra.mxu0 %v1015
    %1017 = vmatprep.subr.mxu0 0.0
    %v1018 = vand.u32 %v853, 4294901760
    %v1019 = vsub.f32 %v853, %v1018
    %v1020 = vand.u32 %v1019, 4294901760
    %v1021 = vsub.f32 %v1019, %v1020
    %v1022 = vand.u32 %v1021, 4294901760
    %1023 = vmatpush1.msra.mxu0 %v1022
    %1024 = vmatprep.subr.mxu0 0.0
    %v1025 = vand.u32 %v852, 4294901760
    %v1026 = vsub.f32 %v852, %v1025
    %v1027 = vand.u32 %v1026, 4294901760
    %v1028 = vsub.f32 %v1026, %v1027
    %v1029 = vand.u32 %v1028, 4294901760
    %1030 = vmatpush1.msra.mxu0 %v1029
    %1031 = vmatprep.subr.mxu0 0.0
    %v1032 = vand.u32 %v851, 4294901760
    %v1033 = vsub.f32 %v851, %v1032
    %v1034 = vand.u32 %v1033, 4294901760
    %v1035 = vsub.f32 %v1033, %v1034
    %v1036 = vand.u32 %v1035, 4294901760
    %1037 = vmatpush1.msra.mxu0 %v1036
    %1038 = vmatprep.subr.mxu0 0.0
    %v1039 = vand.u32 %v850, 4294901760
    %v1040 = vsub.f32 %v850, %v1039
    %v1041 = vand.u32 %v1040, 4294901760
    %v1042 = vsub.f32 %v1040, %v1041
    %v1043 = vand.u32 %v1042, 4294901760
    %1044 = vmatpush1.msra.mxu0 %v1043
    %1045 = vmatprep.subr.mxu0 0.0
    %v1046 = vand.u32 %v849, 4294901760
    %v1047 = vsub.f32 %v849, %v1046
    %v1048 = vand.u32 %v1047, 4294901760
    %v1049 = vsub.f32 %v1047, %v1048
    %v1050 = vand.u32 %v1049, 4294901760
    %1051 = vmatpush1.msra.mxu0 %v1050
    %1052 = vmatprep.subr.mxu0 0.0
    %v1053 = vand.u32 %v848, 4294901760
    %v1054 = vsub.f32 %v848, %v1053
    %v1055 = vand.u32 %v1054, 4294901760
    %v1056 = vsub.f32 %v1054, %v1055
    %v1057 = vand.u32 %v1056, 4294901760
    %1058 = vmatpush1.msra.mxu0 %v1057
    %1059 = vmatprep.subr.mxu0 0.0
    %v1060 = vand.u32 %v847, 4294901760
    %v1061 = vsub.f32 %v847, %v1060
    %v1062 = vand.u32 %v1061, 4294901760
    %v1063 = vsub.f32 %v1061, %v1062
    %v1064 = vand.u32 %v1063, 4294901760
    %1065 = vmatpush1.msra.mxu0 %v1064
    %1066 = vmatprep.subr.mxu0 0.0
    %1067 = vmatpush2.msra.mxu0 0.0
    %1068 = vmatprep.subr.mxu0 0.0
    %1069 = vmatpush2.msra.mxu0 0.0
    %1070 = vmatprep.subr.mxu0 0.0
    %1071 = vmatpush2.msra.mxu0 0.0
    %1072 = vmatprep.subr.mxu0 0.0
    %1073 = vmatpush2.msra.mxu0 0.0
    %1074 = vmatprep.subr.mxu0 0.0
    %1075 = vmatpush2.msra.mxu0 0.0
    %1076 = vmatprep.subr.mxu0 0.0
    %1077 = vmatpush2.msra.mxu0 0.0
    %1078 = vmatprep.subr.mxu0 0.0
    %1079 = vmatpush2.msra.mxu0 0.0
    %1080 = vmatprep.subr.mxu0 0.0
    %1081 = vmatpush2.msra.mxu0 0.0
    %1082 = vmatprep.subr.mxu0 0.0
    %1083 = vmatpush2.msra.mxu0 0.0
    %1084 = vmatprep.subr.mxu0 0.0
    %1085 = vmatpush2.msra.mxu0 0.0
    %1086 = vmatprep.subr.mxu0 0.0
    %1087 = vmatpush2.msra.mxu0 0.0
    %1088 = vmatprep.subr.mxu0 0.0
    %1089 = vmatpush2.msra.mxu0 0.0
    %1090 = vmatprep.subr.mxu0 0.0
    %1091 = vmatpush2.msra.mxu0 0.0
    %1092 = vmatprep.subr.mxu0 0.0
    %1093 = vmatpush2.msra.mxu0 0.0
    %1094 = vmatprep.subr.mxu0 0.0
    %1095 = vmatpush2.msra.mxu0 0.0
    %1096 = vmatprep.subr.mxu0 0.0
    %1097 = vmatpush2.msra.mxu0 0.0
    %1098 = vmatprep.mubr.f32.mxu0 0.0
    %v1099 = vand.u32 %v846, 4294901760
    %1100 = vmatmul.mubr.f32.gmra.mxu0 %v1099
    %v1101 = vpop.f32.mrf.mxu0
    %v1102 = vadd.f32 %v951, %v1101
    %v1103 = vpop.f32.mrf.mxu0
    %1104 = vdwg.mxu0
    %1105 = vmatprep.subr.mxu0 0.0
    %v1106 = vand.u32 %v862, 4294901760
    %v1107 = vsub.f32 %v862, %v1106
    %1108 = vmatpush1.msra.mxu0 %v1107
    %1109 = vmatprep.subr.mxu0 0.0
    %v1110 = vand.u32 %v861, 4294901760
    %v1111 = vsub.f32 %v861, %v1110
    %1112 = vmatpush1.msra.mxu0 %v1111
    %1113 = vmatprep.subr.mxu0 0.0
    %v1114 = vand.u32 %v860, 4294901760
    %v1115 = vsub.f32 %v860, %v1114
    %1116 = vmatpush1.msra.mxu0 %v1115
    %1117 = vmatprep.subr.mxu0 0.0
    %v1118 = vand.u32 %v859, 4294901760
    %v1119 = vsub.f32 %v859, %v1118
    %1120 = vmatpush1.msra.mxu0 %v1119
    %1121 = vmatprep.subr.mxu0 0.0
    %v1122 = vand.u32 %v858, 4294901760
    %v1123 = vsub.f32 %v858, %v1122
    %1124 = vmatpush1.msra.mxu0 %v1123
    %1125 = vmatprep.subr.mxu0 0.0
    %v1126 = vand.u32 %v857, 4294901760
    %v1127 = vsub.f32 %v857, %v1126
    %1128 = vmatpush1.msra.mxu0 %v1127
    %1129 = vmatprep.subr.mxu0 0.0
    %v1130 = vand.u32 %v856, 4294901760
    %v1131 = vsub.f32 %v856, %v1130
    %1132 = vmatpush1.msra.mxu0 %v1131
    %1133 = vmatprep.subr.mxu0 0.0
    %v1134 = vand.u32 %v855, 4294901760
    %v1135 = vsub.f32 %v855, %v1134
    %1136 = vmatpush1.msra.mxu0 %v1135
    %1137 = vmatprep.subr.mxu0 0.0
    %v1138 = vand.u32 %v854, 4294901760
    %v1139 = vsub.f32 %v854, %v1138
    %1140 = vmatpush1.msra.mxu0 %v1139
    %1141 = vmatprep.subr.mxu0 0.0
    %v1142 = vand.u32 %v853, 4294901760
    %v1143 = vsub.f32 %v853, %v1142
    %1144 = vmatpush1.msra.mxu0 %v1143
    %1145 = vmatprep.subr.mxu0 0.0
    %v1146 = vand.u32 %v852, 4294901760
    %v1147 = vsub.f32 %v852, %v1146
    %1148 = vmatpush1.msra.mxu0 %v1147
    %1149 = vmatprep.subr.mxu0 0.0
    %v1150 = vand.u32 %v851, 4294901760
    %v1151 = vsub.f32 %v851, %v1150
    %1152 = vmatpush1.msra.mxu0 %v1151
    %1153 = vmatprep.subr.mxu0 0.0
    %v1154 = vand.u32 %v850, 4294901760
    %v1155 = vsub.f32 %v850, %v1154
    %1156 = vmatpush1.msra.mxu0 %v1155
    %1157 = vmatprep.subr.mxu0 0.0
    %v1158 = vand.u32 %v849, 4294901760
    %v1159 = vsub.f32 %v849, %v1158
    %1160 = vmatpush1.msra.mxu0 %v1159
    %1161 = vmatprep.subr.mxu0 0.0
    %v1162 = vand.u32 %v848, 4294901760
    %v1163 = vsub.f32 %v848, %v1162
    %1164 = vmatpush1.msra.mxu0 %v1163
    %1165 = vmatprep.subr.mxu0 0.0
    %v1166 = vand.u32 %v847, 4294901760
    %v1167 = vsub.f32 %v847, %v1166
    %1168 = vmatpush1.msra.mxu0 %v1167
    %1169 = vmatprep.subr.mxu0 0.0
    %1170 = vmatpush2.msra.mxu0 0.0
    %1171 = vmatprep.subr.mxu0 0.0
    %1172 = vmatpush2.msra.mxu0 0.0
    %1173 = vmatprep.subr.mxu0 0.0
    %1174 = vmatpush2.msra.mxu0 0.0
    %1175 = vmatprep.subr.mxu0 0.0
    %1176 = vmatpush2.msra.mxu0 0.0
    %1177 = vmatprep.subr.mxu0 0.0
    %1178 = vmatpush2.msra.mxu0 0.0
    %1179 = vmatprep.subr.mxu0 0.0
    %1180 = vmatpush2.msra.mxu0 0.0
    %1181 = vmatprep.subr.mxu0 0.0
    %1182 = vmatpush2.msra.mxu0 0.0
    %1183 = vmatprep.subr.mxu0 0.0
    %1184 = vmatpush2.msra.mxu0 0.0
    %1185 = vmatprep.subr.mxu0 0.0
    %1186 = vmatpush2.msra.mxu0 0.0
    %1187 = vmatprep.subr.mxu0 0.0
    %1188 = vmatpush2.msra.mxu0 0.0
    %1189 = vmatprep.subr.mxu0 0.0
    %1190 = vmatpush2.msra.mxu0 0.0
    %1191 = vmatprep.subr.mxu0 0.0
    %1192 = vmatpush2.msra.mxu0 0.0
    %1193 = vmatprep.subr.mxu0 0.0
    %1194 = vmatpush2.msra.mxu0 0.0
    %1195 = vmatprep.subr.mxu0 0.0
    %1196 = vmatpush2.msra.mxu0 0.0
    %1197 = vmatprep.subr.mxu0 0.0
    %1198 = vmatpush2.msra.mxu0 0.0
    %1199 = vmatprep.subr.mxu0 0.0
    %1200 = vmatpush2.msra.mxu0 0.0
    %1201 = vmatprep.mubr.f32.mxu0 0.0
    %v1202 = vand.u32 %v846, 4294901760
    %v1203 = vsub.f32 %v846, %v1202
    %1204 = vmatmul.mubr.f32.gmra.mxu0 %v1203
    %v1205 = vpop.f32.mrf.mxu0
    %v1206 = vadd.f32 %v1102, %v1205
    %v1207 = vpop.f32.mrf.mxu0
    %1208 = vdwg.mxu0
    %1209 = vmatprep.subr.mxu0 0.0
    %v1210 = vand.u32 %v862, 4294901760
    %1211 = vmatpush1.msra.mxu0 %v1210
    %1212 = vmatprep.subr.mxu0 0.0
    %v1213 = vand.u32 %v861, 4294901760
    %1214 = vmatpush1.msra.mxu0 %v1213
    %1215 = vmatprep.subr.mxu0 0.0
    %v1216 = vand.u32 %v860, 4294901760
    %1217 = vmatpush1.msra.mxu0 %v1216
    %1218 = vmatprep.subr.mxu0 0.0
    %v1219 = vand.u32 %v859, 4294901760
    %1220 = vmatpush1.msra.mxu0 %v1219
    %1221 = vmatprep.subr.mxu0 0.0
    %v1222 = vand.u32 %v858, 4294901760
    %1223 = vmatpush1.msra.mxu0 %v1222
    %1224 = vmatprep.subr.mxu0 0.0
    %v1225 = vand.u32 %v857, 4294901760
    %1226 = vmatpush1.msra.mxu0 %v1225
    %1227 = vmatprep.subr.mxu0 0.0
    %v1228 = vand.u32 %v856, 4294901760
    %1229 = vmatpush1.msra.mxu0 %v1228
    %1230 = vmatprep.subr.mxu0 0.0
    %v1231 = vand.u32 %v855, 4294901760
    %1232 = vmatpush1.msra.mxu0 %v1231
    %1233 = vmatprep.subr.mxu0 0.0
    %v1234 = vand.u32 %v854, 4294901760
    %1235 = vmatpush1.msra.mxu0 %v1234
    %1236 = vmatprep.subr.mxu0 0.0
    %v1237 = vand.u32 %v853, 4294901760
    %1238 = vmatpush1.msra.mxu0 %v1237
    %1239 = vmatprep.subr.mxu0 0.0
    %v1240 = vand.u32 %v852, 4294901760
    %1241 = vmatpush1.msra.mxu0 %v1240
    %1242 = vmatprep.subr.mxu0 0.0
    %v1243 = vand.u32 %v851, 4294901760
    %1244 = vmatpush1.msra.mxu0 %v1243
    %1245 = vmatprep.subr.mxu0 0.0
    %v1246 = vand.u32 %v850, 4294901760
    %1247 = vmatpush1.msra.mxu0 %v1246
    %1248 = vmatprep.subr.mxu0 0.0
    %v1249 = vand.u32 %v849, 4294901760
    %1250 = vmatpush1.msra.mxu0 %v1249
    %1251 = vmatprep.subr.mxu0 0.0
    %v1252 = vand.u32 %v848, 4294901760
    %1253 = vmatpush1.msra.mxu0 %v1252
    %1254 = vmatprep.subr.mxu0 0.0
    %v1255 = vand.u32 %v847, 4294901760
    %1256 = vmatpush1.msra.mxu0 %v1255
    %1257 = vmatprep.subr.mxu0 0.0
    %1258 = vmatpush2.msra.mxu0 0.0
    %1259 = vmatprep.subr.mxu0 0.0
    %1260 = vmatpush2.msra.mxu0 0.0
    %1261 = vmatprep.subr.mxu0 0.0
    %1262 = vmatpush2.msra.mxu0 0.0
    %1263 = vmatprep.subr.mxu0 0.0
    %1264 = vmatpush2.msra.mxu0 0.0
    %1265 = vmatprep.subr.mxu0 0.0
    %1266 = vmatpush2.msra.mxu0 0.0
    %1267 = vmatprep.subr.mxu0 0.0
    %1268 = vmatpush2.msra.mxu0 0.0
    %1269 = vmatprep.subr.mxu0 0.0
    %1270 = vmatpush2.msra.mxu0 0.0
    %1271 = vmatprep.subr.mxu0 0.0
    %1272 = vmatpush2.msra.mxu0 0.0
    %1273 = vmatprep.subr.mxu0 0.0
    %1274 = vmatpush2.msra.mxu0 0.0
    %1275 = vmatprep.subr.mxu0 0.0
    %1276 = vmatpush2.msra.mxu0 0.0
    %1277 = vmatprep.subr.mxu0 0.0
    %1278 = vmatpush2.msra.mxu0 0.0
    %1279 = vmatprep.subr.mxu0 0.0
    %1280 = vmatpush2.msra.mxu0 0.0
    %1281 = vmatprep.subr.mxu0 0.0
    %1282 = vmatpush2.msra.mxu0 0.0
    %1283 = vmatprep.subr.mxu0 0.0
    %1284 = vmatpush2.msra.mxu0 0.0
    %1285 = vmatprep.subr.mxu0 0.0
    %1286 = vmatpush2.msra.mxu0 0.0
    %1287 = vmatprep.subr.mxu0 0.0
    %1288 = vmatpush2.msra.mxu0 0.0
    %1289 = vmatprep.mubr.f32.mxu0 0.0
    %v1290 = vand.u32 %v846, 4294901760
    %v1291 = vsub.f32 %v846, %v1290
    %v1292 = vand.u32 %v1291, 4294901760
    %1293 = vmatmul.mubr.f32.gmra.mxu0 %v1292
    %v1294 = vpop.f32.mrf.mxu0
    %v1295 = vadd.f32 %v1206, %v1294
    %v1296 = vpop.f32.mrf.mxu0
    %1297 = vdwg.mxu0
    %1298 = vmatprep.subr.mxu0 0.0
    %v1299 = vand.u32 %v862, 4294901760
    %v1300 = vsub.f32 %v862, %v1299
    %v1301 = vand.u32 %v1300, 4294901760
    %1302 = vmatpush1.msra.mxu0 %v1301
    %1303 = vmatprep.subr.mxu0 0.0
    %v1304 = vand.u32 %v861, 4294901760
    %v1305 = vsub.f32 %v861, %v1304
    %v1306 = vand.u32 %v1305, 4294901760
    %1307 = vmatpush1.msra.mxu0 %v1306
    %1308 = vmatprep.subr.mxu0 0.0
    %v1309 = vand.u32 %v860, 4294901760
    %v1310 = vsub.f32 %v860, %v1309
    %v1311 = vand.u32 %v1310, 4294901760
    %1312 = vmatpush1.msra.mxu0 %v1311
    %1313 = vmatprep.subr.mxu0 0.0
    %v1314 = vand.u32 %v859, 4294901760
    %v1315 = vsub.f32 %v859, %v1314
    %v1316 = vand.u32 %v1315, 4294901760
    %1317 = vmatpush1.msra.mxu0 %v1316
    %1318 = vmatprep.subr.mxu0 0.0
    %v1319 = vand.u32 %v858, 4294901760
    %v1320 = vsub.f32 %v858, %v1319
    %v1321 = vand.u32 %v1320, 4294901760
    %1322 = vmatpush1.msra.mxu0 %v1321
    %1323 = vmatprep.subr.mxu0 0.0
    %v1324 = vand.u32 %v857, 4294901760
    %v1325 = vsub.f32 %v857, %v1324
    %v1326 = vand.u32 %v1325, 4294901760
    %1327 = vmatpush1.msra.mxu0 %v1326
    %1328 = vmatprep.subr.mxu0 0.0
    %v1329 = vand.u32 %v856, 4294901760
    %v1330 = vsub.f32 %v856, %v1329
    %v1331 = vand.u32 %v1330, 4294901760
    %1332 = vmatpush1.msra.mxu0 %v1331
    %1333 = vmatprep.subr.mxu0 0.0
    %v1334 = vand.u32 %v855, 4294901760
    %v1335 = vsub.f32 %v855, %v1334
    %v1336 = vand.u32 %v1335, 4294901760
    %1337 = vmatpush1.msra.mxu0 %v1336
    %1338 = vmatprep.subr.mxu0 0.0
    %v1339 = vand.u32 %v854, 4294901760
    %v1340 = vsub.f32 %v854, %v1339
    %v1341 = vand.u32 %v1340, 4294901760
    %1342 = vmatpush1.msra.mxu0 %v1341
    %1343 = vmatprep.subr.mxu0 0.0
    %v1344 = vand.u32 %v853, 4294901760
    %v1345 = vsub.f32 %v853, %v1344
    %v1346 = vand.u32 %v1345, 4294901760
    %1347 = vmatpush1.msra.mxu0 %v1346
    %1348 = vmatprep.subr.mxu0 0.0
    %v1349 = vand.u32 %v852, 4294901760
    %v1350 = vsub.f32 %v852, %v1349
    %v1351 = vand.u32 %v1350, 4294901760
    %1352 = vmatpush1.msra.mxu0 %v1351
    %1353 = vmatprep.subr.mxu0 0.0
    %v1354 = vand.u32 %v851, 4294901760
    %v1355 = vsub.f32 %v851, %v1354
    %v1356 = vand.u32 %v1355, 4294901760
    %1357 = vmatpush1.msra.mxu0 %v1356
    %1358 = vmatprep.subr.mxu0 0.0
    %v1359 = vand.u32 %v850, 4294901760
    %v1360 = vsub.f32 %v850, %v1359
    %v1361 = vand.u32 %v1360, 4294901760
    %1362 = vmatpush1.msra.mxu0 %v1361
    %1363 = vmatprep.subr.mxu0 0.0
    %v1364 = vand.u32 %v849, 4294901760
    %v1365 = vsub.f32 %v849, %v1364
    %v1366 = vand.u32 %v1365, 4294901760
    %1367 = vmatpush1.msra.mxu0 %v1366
    %1368 = vmatprep.subr.mxu0 0.0
    %v1369 = vand.u32 %v848, 4294901760
    %v1370 = vsub.f32 %v848, %v1369
    %v1371 = vand.u32 %v1370, 4294901760
    %1372 = vmatpush1.msra.mxu0 %v1371
    %1373 = vmatprep.subr.mxu0 0.0
    %v1374 = vand.u32 %v847, 4294901760
    %v1375 = vsub.f32 %v847, %v1374
    %v1376 = vand.u32 %v1375, 4294901760
    %1377 = vmatpush1.msra.mxu0 %v1376
    %1378 = vmatprep.subr.mxu0 0.0
    %1379 = vmatpush2.msra.mxu0 0.0
    %1380 = vmatprep.subr.mxu0 0.0
    %1381 = vmatpush2.msra.mxu0 0.0
    %1382 = vmatprep.subr.mxu0 0.0
    %1383 = vmatpush2.msra.mxu0 0.0
    %1384 = vmatprep.subr.mxu0 0.0
    %1385 = vmatpush2.msra.mxu0 0.0
    %1386 = vmatprep.subr.mxu0 0.0
    %1387 = vmatpush2.msra.mxu0 0.0
    %1388 = vmatprep.subr.mxu0 0.0
    %1389 = vmatpush2.msra.mxu0 0.0
    %1390 = vmatprep.subr.mxu0 0.0
    %1391 = vmatpush2.msra.mxu0 0.0
    %1392 = vmatprep.subr.mxu0 0.0
    %1393 = vmatpush2.msra.mxu0 0.0
    %1394 = vmatprep.subr.mxu0 0.0
    %1395 = vmatpush2.msra.mxu0 0.0
    %1396 = vmatprep.subr.mxu0 0.0
    %1397 = vmatpush2.msra.mxu0 0.0
    %1398 = vmatprep.subr.mxu0 0.0
    %1399 = vmatpush2.msra.mxu0 0.0
    %1400 = vmatprep.subr.mxu0 0.0
    %1401 = vmatpush2.msra.mxu0 0.0
    %1402 = vmatprep.subr.mxu0 0.0
    %1403 = vmatpush2.msra.mxu0 0.0
    %1404 = vmatprep.subr.mxu0 0.0
    %1405 = vmatpush2.msra.mxu0 0.0
    %1406 = vmatprep.subr.mxu0 0.0
    %1407 = vmatpush2.msra.mxu0 0.0
    %1408 = vmatprep.subr.mxu0 0.0
    %1409 = vmatpush2.msra.mxu0 0.0
    %1410 = vmatprep.mubr.f32.mxu0 0.0
    %v1411 = vand.u32 %v846, 4294901760
    %1412 = vmatmul.mubr.f32.gmra.mxu0 %v1411
    %v1413 = vpop.f32.mrf.mxu0
    %v1414 = vadd.f32 %v1295, %v1413
    %v1415 = vpop.f32.mrf.mxu0
    %1416 = vdwg.mxu0
    %1417 = vmatprep.subr.mxu0 0.0
    %v1418 = vand.u32 %v862, 4294901760
    %1419 = vmatpush1.msra.mxu0 %v1418
    %1420 = vmatprep.subr.mxu0 0.0
    %v1421 = vand.u32 %v861, 4294901760
    %1422 = vmatpush1.msra.mxu0 %v1421
    %1423 = vmatprep.subr.mxu0 0.0
    %v1424 = vand.u32 %v860, 4294901760
    %1425 = vmatpush1.msra.mxu0 %v1424
    %1426 = vmatprep.subr.mxu0 0.0
    %v1427 = vand.u32 %v859, 4294901760
    %1428 = vmatpush1.msra.mxu0 %v1427
    %1429 = vmatprep.subr.mxu0 0.0
    %v1430 = vand.u32 %v858, 4294901760
    %1431 = vmatpush1.msra.mxu0 %v1430
    %1432 = vmatprep.subr.mxu0 0.0
    %v1433 = vand.u32 %v857, 4294901760
    %1434 = vmatpush1.msra.mxu0 %v1433
    %1435 = vmatprep.subr.mxu0 0.0
    %v1436 = vand.u32 %v856, 4294901760
    %1437 = vmatpush1.msra.mxu0 %v1436
    %1438 = vmatprep.subr.mxu0 0.0
    %v1439 = vand.u32 %v855, 4294901760
    %1440 = vmatpush1.msra.mxu0 %v1439
    %1441 = vmatprep.subr.mxu0 0.0
    %v1442 = vand.u32 %v854, 4294901760
    %1443 = vmatpush1.msra.mxu0 %v1442
    %1444 = vmatprep.subr.mxu0 0.0
    %v1445 = vand.u32 %v853, 4294901760
    %1446 = vmatpush1.msra.mxu0 %v1445
    %1447 = vmatprep.subr.mxu0 0.0
    %v1448 = vand.u32 %v852, 4294901760
    %1449 = vmatpush1.msra.mxu0 %v1448
    %1450 = vmatprep.subr.mxu0 0.0
    %v1451 = vand.u32 %v851, 4294901760
    %1452 = vmatpush1.msra.mxu0 %v1451
    %1453 = vmatprep.subr.mxu0 0.0
    %v1454 = vand.u32 %v850, 4294901760
    %1455 = vmatpush1.msra.mxu0 %v1454
    %1456 = vmatprep.subr.mxu0 0.0
    %v1457 = vand.u32 %v849, 4294901760
    %1458 = vmatpush1.msra.mxu0 %v1457
    %1459 = vmatprep.subr.mxu0 0.0
    %v1460 = vand.u32 %v848, 4294901760
    %1461 = vmatpush1.msra.mxu0 %v1460
    %1462 = vmatprep.subr.mxu0 0.0
    %v1463 = vand.u32 %v847, 4294901760
    %1464 = vmatpush1.msra.mxu0 %v1463
    %1465 = vmatprep.subr.mxu0 0.0
    %1466 = vmatpush2.msra.mxu0 0.0
    %1467 = vmatprep.subr.mxu0 0.0
    %1468 = vmatpush2.msra.mxu0 0.0
    %1469 = vmatprep.subr.mxu0 0.0
    %1470 = vmatpush2.msra.mxu0 0.0
    %1471 = vmatprep.subr.mxu0 0.0
    %1472 = vmatpush2.msra.mxu0 0.0
    %1473 = vmatprep.subr.mxu0 0.0
    %1474 = vmatpush2.msra.mxu0 0.0
    %1475 = vmatprep.subr.mxu0 0.0
    %1476 = vmatpush2.msra.mxu0 0.0
    %1477 = vmatprep.subr.mxu0 0.0
    %1478 = vmatpush2.msra.mxu0 0.0
    %1479 = vmatprep.subr.mxu0 0.0
    %1480 = vmatpush2.msra.mxu0 0.0
    %1481 = vmatprep.subr.mxu0 0.0
    %1482 = vmatpush2.msra.mxu0 0.0
    %1483 = vmatprep.subr.mxu0 0.0
    %1484 = vmatpush2.msra.mxu0 0.0
    %1485 = vmatprep.subr.mxu0 0.0
    %1486 = vmatpush2.msra.mxu0 0.0
    %1487 = vmatprep.subr.mxu0 0.0
    %1488 = vmatpush2.msra.mxu0 0.0
    %1489 = vmatprep.subr.mxu0 0.0
    %1490 = vmatpush2.msra.mxu0 0.0
    %1491 = vmatprep.subr.mxu0 0.0
    %1492 = vmatpush2.msra.mxu0 0.0
    %1493 = vmatprep.subr.mxu0 0.0
    %1494 = vmatpush2.msra.mxu0 0.0
    %1495 = vmatprep.subr.mxu0 0.0
    %1496 = vmatpush2.msra.mxu0 0.0
    %1497 = vmatprep.mubr.f32.mxu0 0.0
    %v1498 = vand.u32 %v846, 4294901760
    %1499 = vmatmul.mubr.f32.gmra.mxu0 %v1498
    %v1500 = vpop.f32.mrf.mxu0
    %v1501 = vadd.f32 %v1414, %v1500
    %v1502 = vpop.f32.mrf.mxu0
    %1503 = vdwg.mxu0
    %v1504 = vld [vmem:[%s2] sm:$0xff]
    %1505 = vset.pattern.permute.xlu0 0
    %1506 = vperm.xlu0 %1505, %v1504
    %v1507 = vpop.permute.xlu0 %1506
    %vm1508 = vcmp.eq.s32.totalorder %v1507, %v116
    %v1509 = vsel %vm1508, 1.0, 0.0
    %v1510 = vadd.f32 %v1509, 0.0
    %1511 = vset.pattern.permute.xlu0 1
    %1512 = vperm.xlu0 %1511, %v1504
    %v1513 = vpop.permute.xlu0 %1512
    %vm1514 = vcmp.eq.s32.totalorder %v1513, %v116
    %v1515 = vsel %vm1514, 1.0, 0.0
    %v1516 = vadd.f32 %v1510, %v1515
    %1517 = vset.pattern.permute.xlu0 2
    %1518 = vperm.xlu0 %1517, %v1504
    %v1519 = vpop.permute.xlu0 %1518
    %vm1520 = vcmp.eq.s32.totalorder %v1519, %v116
    %v1521 = vsel %vm1520, 1.0, 0.0
    %v1522 = vadd.f32 %v1516, %v1521
    %1523 = vset.pattern.permute.xlu0 3
    %1524 = vperm.xlu0 %1523, %v1504
    %v1525 = vpop.permute.xlu0 %1524
    %vm1526 = vcmp.eq.s32.totalorder %v1525, %v116
    %v1527 = vsel %vm1526, 1.0, 0.0
    %v1528 = vadd.f32 %v1522, %v1527
    %1529 = vset.pattern.permute.xlu0 4
    %1530 = vperm.xlu0 %1529, %v1504
    %v1531 = vpop.permute.xlu0 %1530
    %vm1532 = vcmp.eq.s32.totalorder %v1531, %v116
    %v1533 = vsel %vm1532, 1.0, 0.0
    %v1534 = vadd.f32 %v1528, %v1533
    %1535 = vset.pattern.permute.xlu0 5
    %1536 = vperm.xlu0 %1535, %v1504
    %v1537 = vpop.permute.xlu0 %1536
    %vm1538 = vcmp.eq.s32.totalorder %v1537, %v116
    %v1539 = vsel %vm1538, 1.0, 0.0
    %v1540 = vadd.f32 %v1534, %v1539
    %v1541 = vld [vmem:[#allocation6] sm:$0xff]
    %v1542 = vld [vmem:[#allocation6 + $0x8] sm:$0xff]
    %v1543 = vld [vmem:[#allocation6 + $0x10] sm:$0xff]
    %v1544 = vld [vmem:[#allocation6 + $0x18] sm:$0xff]
    %v1545 = vld [vmem:[#allocation6 + $0x20] sm:$0xff]
    %v1546 = vld [vmem:[#allocation6 + $0x28] sm:$0xff]
    %v1547 = vld [vmem:[#allocation6 + $0x30] sm:$0xff]
    %v1548 = vld [vmem:[#allocation6 + $0x38] sm:$0xff]
    %v1549 = vld [vmem:[#allocation6 + $0x40] sm:$0xff]
    %v1550 = vld [vmem:[#allocation6 + $0x48] sm:$0xff]
    %v1551 = vld [vmem:[#allocation6 + $0x50] sm:$0xff]
    %v1552 = vld [vmem:[#allocation6 + $0x58] sm:$0xff]
    %v1553 = vld [vmem:[#allocation6 + $0x60] sm:$0xff]
    %v1554 = vld [vmem:[#allocation6 + $0x68] sm:$0xff]
    %v1555 = vld [vmem:[#allocation6 + $0x70] sm:$0xff]
    %v1556 = vld [vmem:[#allocation6 + $0x78] sm:$0xff]
    %1557 = vmatprep.subr.mxu0 0.0
    %v1558 = vand.u32 %v1556, 4294901760
    %1559 = vmatpush1.msra.mxu0 %v1558
    %1560 = vmatprep.subr.mxu0 0.0
    %v1561 = vand.u32 %v1555, 4294901760
    %1562 = vmatpush1.msra.mxu0 %v1561
    %1563 = vmatprep.subr.mxu0 0.0
    %v1564 = vand.u32 %v1554, 4294901760
    %1565 = vmatpush1.msra.mxu0 %v1564
    %1566 = vmatprep.subr.mxu0 0.0
    %v1567 = vand.u32 %v1553, 4294901760
    %1568 = vmatpush1.msra.mxu0 %v1567
    %1569 = vmatprep.subr.mxu0 0.0
    %v1570 = vand.u32 %v1552, 4294901760
    %1571 = vmatpush1.msra.mxu0 %v1570
    %1572 = vmatprep.subr.mxu0 0.0
    %v1573 = vand.u32 %v1551, 4294901760
    %1574 = vmatpush1.msra.mxu0 %v1573
    %1575 = vmatprep.subr.mxu0 0.0
    %v1576 = vand.u32 %v1550, 4294901760
    %1577 = vmatpush1.msra.mxu0 %v1576
    %1578 = vmatprep.subr.mxu0 0.0
    %v1579 = vand.u32 %v1549, 4294901760
    %1580 = vmatpush1.msra.mxu0 %v1579
    %1581 = vmatprep.subr.mxu0 0.0
    %v1582 = vand.u32 %v1548, 4294901760
    %1583 = vmatpush1.msra.mxu0 %v1582
    %1584 = vmatprep.subr.mxu0 0.0
    %v1585 = vand.u32 %v1547, 4294901760
    %1586 = vmatpush1.msra.mxu0 %v1585
    %1587 = vmatprep.subr.mxu0 0.0
    %v1588 = vand.u32 %v1546, 4294901760
    %1589 = vmatpush1.msra.mxu0 %v1588
    %1590 = vmatprep.subr.mxu0 0.0
    %v1591 = vand.u32 %v1545, 4294901760
    %1592 = vmatpush1.msra.mxu0 %v1591
    %1593 = vmatprep.subr.mxu0 0.0
    %v1594 = vand.u32 %v1544, 4294901760
    %1595 = vmatpush1.msra.mxu0 %v1594
    %1596 = vmatprep.subr.mxu0 0.0
    %v1597 = vand.u32 %v1543, 4294901760
    %1598 = vmatpush1.msra.mxu0 %v1597
    %1599 = vmatprep.subr.mxu0 0.0
    %v1600 = vand.u32 %v1542, 4294901760
    %1601 = vmatpush1.msra.mxu0 %v1600
    %1602 = vmatprep.subr.mxu0 0.0
    %v1603 = vand.u32 %v1541, 4294901760
    %1604 = vmatpush1.msra.mxu0 %v1603
    %1605 = vmatprep.subr.mxu0 0.0
    %1606 = vmatpush2.msra.mxu0 0.0
    %1607 = vmatprep.subr.mxu0 0.0
    %1608 = vmatpush2.msra.mxu0 0.0
    %1609 = vmatprep.subr.mxu0 0.0
    %1610 = vmatpush2.msra.mxu0 0.0
    %1611 = vmatprep.subr.mxu0 0.0
    %1612 = vmatpush2.msra.mxu0 0.0
    %1613 = vmatprep.subr.mxu0 0.0
    %1614 = vmatpush2.msra.mxu0 0.0
    %1615 = vmatprep.subr.mxu0 0.0
    %1616 = vmatpush2.msra.mxu0 0.0
    %1617 = vmatprep.subr.mxu0 0.0
    %1618 = vmatpush2.msra.mxu0 0.0
    %1619 = vmatprep.subr.mxu0 0.0
    %1620 = vmatpush2.msra.mxu0 0.0
    %1621 = vmatprep.subr.mxu0 0.0
    %1622 = vmatpush2.msra.mxu0 0.0
    %1623 = vmatprep.subr.mxu0 0.0
    %1624 = vmatpush2.msra.mxu0 0.0
    %1625 = vmatprep.subr.mxu0 0.0
    %1626 = vmatpush2.msra.mxu0 0.0
    %1627 = vmatprep.subr.mxu0 0.0
    %1628 = vmatpush2.msra.mxu0 0.0
    %1629 = vmatprep.subr.mxu0 0.0
    %1630 = vmatpush2.msra.mxu0 0.0
    %1631 = vmatprep.subr.mxu0 0.0
    %1632 = vmatpush2.msra.mxu0 0.0
    %1633 = vmatprep.subr.mxu0 0.0
    %1634 = vmatpush2.msra.mxu0 0.0
    %1635 = vmatprep.subr.mxu0 0.0
    %1636 = vmatpush2.msra.mxu0 0.0
    %1637 = vmatprep.mubr.f32.mxu0 0.0
    %v1638 = vand.u32 %v1540, 4294901760
    %v1639 = vsub.f32 %v1540, %v1638
    %v1640 = vand.u32 %v1639, 4294901760
    %v1641 = vsub.f32 %v1639, %v1640
    %v1642 = vand.u32 %v1641, 4294901760
    %1643 = vmatmul.mubr.f32.gmra.mxu0 %v1642
    %v1644 = vpop.f32.mrf.mxu0
    %v1645 = vadd.f32 0.0, %v1644
    %v1646 = vpop.f32.mrf.mxu0
    %1647 = vdwg.mxu0
    %1648 = vmatprep.subr.mxu0 0.0
    %v1649 = vand.u32 %v1556, 4294901760
    %v1650 = vsub.f32 %v1556, %v1649
    %v1651 = vand.u32 %v1650, 4294901760
    %v1652 = vsub.f32 %v1650, %v1651
    %v1653 = vand.u32 %v1652, 4294901760
    %1654 = vmatpush1.msra.mxu0 %v1653
    %1655 = vmatprep.subr.mxu0 0.0
    %v1656 = vand.u32 %v1555, 4294901760
    %v1657 = vsub.f32 %v1555, %v1656
    %v1658 = vand.u32 %v1657, 4294901760
    %v1659 = vsub.f32 %v1657, %v1658
    %v1660 = vand.u32 %v1659, 4294901760
    %1661 = vmatpush1.msra.mxu0 %v1660
    %1662 = vmatprep.subr.mxu0 0.0
    %v1663 = vand.u32 %v1554, 4294901760
    %v1664 = vsub.f32 %v1554, %v1663
    %v1665 = vand.u32 %v1664, 4294901760
    %v1666 = vsub.f32 %v1664, %v1665
    %v1667 = vand.u32 %v1666, 4294901760
    %1668 = vmatpush1.msra.mxu0 %v1667
    %1669 = vmatprep.subr.mxu0 0.0
    %v1670 = vand.u32 %v1553, 4294901760
    %v1671 = vsub.f32 %v1553, %v1670
    %v1672 = vand.u32 %v1671, 4294901760
    %v1673 = vsub.f32 %v1671, %v1672
    %v1674 = vand.u32 %v1673, 4294901760
    %1675 = vmatpush1.msra.mxu0 %v1674
    %1676 = vmatprep.subr.mxu0 0.0
    %v1677 = vand.u32 %v1552, 4294901760
    %v1678 = vsub.f32 %v1552, %v1677
    %v1679 = vand.u32 %v1678, 4294901760
    %v1680 = vsub.f32 %v1678, %v1679
    %v1681 = vand.u32 %v1680, 4294901760
    %1682 = vmatpush1.msra.mxu0 %v1681
    %1683 = vmatprep.subr.mxu0 0.0
    %v1684 = vand.u32 %v1551, 4294901760
    %v1685 = vsub.f32 %v1551, %v1684
    %v1686 = vand.u32 %v1685, 4294901760
    %v1687 = vsub.f32 %v1685, %v1686
    %v1688 = vand.u32 %v1687, 4294901760
    %1689 = vmatpush1.msra.mxu0 %v1688
    %1690 = vmatprep.subr.mxu0 0.0
    %v1691 = vand.u32 %v1550, 4294901760
    %v1692 = vsub.f32 %v1550, %v1691
    %v1693 = vand.u32 %v1692, 4294901760
    %v1694 = vsub.f32 %v1692, %v1693
    %v1695 = vand.u32 %v1694, 4294901760
    %1696 = vmatpush1.msra.mxu0 %v1695
    %1697 = vmatprep.subr.mxu0 0.0
    %v1698 = vand.u32 %v1549, 4294901760
    %v1699 = vsub.f32 %v1549, %v1698
    %v1700 = vand.u32 %v1699, 4294901760
    %v1701 = vsub.f32 %v1699, %v1700
    %v1702 = vand.u32 %v1701, 4294901760
    %1703 = vmatpush1.msra.mxu0 %v1702
    %1704 = vmatprep.subr.mxu0 0.0
    %v1705 = vand.u32 %v1548, 4294901760
    %v1706 = vsub.f32 %v1548, %v1705
    %v1707 = vand.u32 %v1706, 4294901760
    %v1708 = vsub.f32 %v1706, %v1707
    %v1709 = vand.u32 %v1708, 4294901760
    %1710 = vmatpush1.msra.mxu0 %v1709
    %1711 = vmatprep.subr.mxu0 0.0
    %v1712 = vand.u32 %v1547, 4294901760
    %v1713 = vsub.f32 %v1547, %v1712
    %v1714 = vand.u32 %v1713, 4294901760
    %v1715 = vsub.f32 %v1713, %v1714
    %v1716 = vand.u32 %v1715, 4294901760
    %1717 = vmatpush1.msra.mxu0 %v1716
    %1718 = vmatprep.subr.mxu0 0.0
    %v1719 = vand.u32 %v1546, 4294901760
    %v1720 = vsub.f32 %v1546, %v1719
    %v1721 = vand.u32 %v1720, 4294901760
    %v1722 = vsub.f32 %v1720, %v1721
    %v1723 = vand.u32 %v1722, 4294901760
    %1724 = vmatpush1.msra.mxu0 %v1723
    %1725 = vmatprep.subr.mxu0 0.0
    %v1726 = vand.u32 %v1545, 4294901760
    %v1727 = vsub.f32 %v1545, %v1726
    %v1728 = vand.u32 %v1727, 4294901760
    %v1729 = vsub.f32 %v1727, %v1728
    %v1730 = vand.u32 %v1729, 4294901760
    %1731 = vmatpush1.msra.mxu0 %v1730
    %1732 = vmatprep.subr.mxu0 0.0
    %v1733 = vand.u32 %v1544, 4294901760
    %v1734 = vsub.f32 %v1544, %v1733
    %v1735 = vand.u32 %v1734, 4294901760
    %v1736 = vsub.f32 %v1734, %v1735
    %v1737 = vand.u32 %v1736, 4294901760
    %1738 = vmatpush1.msra.mxu0 %v1737
    %1739 = vmatprep.subr.mxu0 0.0
    %v1740 = vand.u32 %v1543, 4294901760
    %v1741 = vsub.f32 %v1543, %v1740
    %v1742 = vand.u32 %v1741, 4294901760
    %v1743 = vsub.f32 %v1741, %v1742
    %v1744 = vand.u32 %v1743, 4294901760
    %1745 = vmatpush1.msra.mxu0 %v1744
    %1746 = vmatprep.subr.mxu0 0.0
    %v1747 = vand.u32 %v1542, 4294901760
    %v1748 = vsub.f32 %v1542, %v1747
    %v1749 = vand.u32 %v1748, 4294901760
    %v1750 = vsub.f32 %v1748, %v1749
    %v1751 = vand.u32 %v1750, 4294901760
    %1752 = vmatpush1.msra.mxu0 %v1751
    %1753 = vmatprep.subr.mxu0 0.0
    %v1754 = vand.u32 %v1541, 4294901760
    %v1755 = vsub.f32 %v1541, %v1754
    %v1756 = vand.u32 %v1755, 4294901760
    %v1757 = vsub.f32 %v1755, %v1756
    %v1758 = vand.u32 %v1757, 4294901760
    %1759 = vmatpush1.msra.mxu0 %v1758
    %1760 = vmatprep.subr.mxu0 0.0
    %1761 = vmatpush2.msra.mxu0 0.0
    %1762 = vmatprep.subr.mxu0 0.0
    %1763 = vmatpush2.msra.mxu0 0.0
    %1764 = vmatprep.subr.mxu0 0.0
    %1765 = vmatpush2.msra.mxu0 0.0
    %1766 = vmatprep.subr.mxu0 0.0
    %1767 = vmatpush2.msra.mxu0 0.0
    %1768 = vmatprep.subr.mxu0 0.0
    %1769 = vmatpush2.msra.mxu0 0.0
    %1770 = vmatprep.subr.mxu0 0.0
    %1771 = vmatpush2.msra.mxu0 0.0
    %1772 = vmatprep.subr.mxu0 0.0
    %1773 = vmatpush2.msra.mxu0 0.0
    %1774 = vmatprep.subr.mxu0 0.0
    %1775 = vmatpush2.msra.mxu0 0.0
    %1776 = vmatprep.subr.mxu0 0.0
    %1777 = vmatpush2.msra.mxu0 0.0
    %1778 = vmatprep.subr.mxu0 0.0
    %1779 = vmatpush2.msra.mxu0 0.0
    %1780 = vmatprep.subr.mxu0 0.0
    %1781 = vmatpush2.msra.mxu0 0.0
    %1782 = vmatprep.subr.mxu0 0.0
    %1783 = vmatpush2.msra.mxu0 0.0
    %1784 = vmatprep.subr.mxu0 0.0
    %1785 = vmatpush2.msra.mxu0 0.0
    %1786 = vmatprep.subr.mxu0 0.0
    %1787 = vmatpush2.msra.mxu0 0.0
    %1788 = vmatprep.subr.mxu0 0.0
    %1789 = vmatpush2.msra.mxu0 0.0
    %1790 = vmatprep.subr.mxu0 0.0
    %1791 = vmatpush2.msra.mxu0 0.0
    %1792 = vmatprep.mubr.f32.mxu0 0.0
    %v1793 = vand.u32 %v1540, 4294901760
    %1794 = vmatmul.mubr.f32.gmra.mxu0 %v1793
    %v1795 = vpop.f32.mrf.mxu0
    %v1796 = vadd.f32 %v1645, %v1795
    %v1797 = vpop.f32.mrf.mxu0
    %1798 = vdwg.mxu0
    %1799 = vmatprep.subr.mxu0 0.0
    %v1800 = vand.u32 %v1556, 4294901760
    %v1801 = vsub.f32 %v1556, %v1800
    %1802 = vmatpush1.msra.mxu0 %v1801
    %1803 = vmatprep.subr.mxu0 0.0
    %v1804 = vand.u32 %v1555, 4294901760
    %v1805 = vsub.f32 %v1555, %v1804
    %1806 = vmatpush1.msra.mxu0 %v1805
    %1807 = vmatprep.subr.mxu0 0.0
    %v1808 = vand.u32 %v1554, 4294901760
    %v1809 = vsub.f32 %v1554, %v1808
    %1810 = vmatpush1.msra.mxu0 %v1809
    %1811 = vmatprep.subr.mxu0 0.0
    %v1812 = vand.u32 %v1553, 4294901760
    %v1813 = vsub.f32 %v1553, %v1812
    %1814 = vmatpush1.msra.mxu0 %v1813
    %1815 = vmatprep.subr.mxu0 0.0
    %v1816 = vand.u32 %v1552, 4294901760
    %v1817 = vsub.f32 %v1552, %v1816
    %1818 = vmatpush1.msra.mxu0 %v1817
    %1819 = vmatprep.subr.mxu0 0.0
    %v1820 = vand.u32 %v1551, 4294901760
    %v1821 = vsub.f32 %v1551, %v1820
    %1822 = vmatpush1.msra.mxu0 %v1821
    %1823 = vmatprep.subr.mxu0 0.0
    %v1824 = vand.u32 %v1550, 4294901760
    %v1825 = vsub.f32 %v1550, %v1824
    %1826 = vmatpush1.msra.mxu0 %v1825
    %1827 = vmatprep.subr.mxu0 0.0
    %v1828 = vand.u32 %v1549, 4294901760
    %v1829 = vsub.f32 %v1549, %v1828
    %1830 = vmatpush1.msra.mxu0 %v1829
    %1831 = vmatprep.subr.mxu0 0.0
    %v1832 = vand.u32 %v1548, 4294901760
    %v1833 = vsub.f32 %v1548, %v1832
    %1834 = vmatpush1.msra.mxu0 %v1833
    %1835 = vmatprep.subr.mxu0 0.0
    %v1836 = vand.u32 %v1547, 4294901760
    %v1837 = vsub.f32 %v1547, %v1836
    %1838 = vmatpush1.msra.mxu0 %v1837
    %1839 = vmatprep.subr.mxu0 0.0
    %v1840 = vand.u32 %v1546, 4294901760
    %v1841 = vsub.f32 %v1546, %v1840
    %1842 = vmatpush1.msra.mxu0 %v1841
    %1843 = vmatprep.subr.mxu0 0.0
    %v1844 = vand.u32 %v1545, 4294901760
    %v1845 = vsub.f32 %v1545, %v1844
    %1846 = vmatpush1.msra.mxu0 %v1845
    %1847 = vmatprep.subr.mxu0 0.0
    %v1848 = vand.u32 %v1544, 4294901760
    %v1849 = vsub.f32 %v1544, %v1848
    %1850 = vmatpush1.msra.mxu0 %v1849
    %1851 = vmatprep.subr.mxu0 0.0
    %v1852 = vand.u32 %v1543, 4294901760
    %v1853 = vsub.f32 %v1543, %v1852
    %1854 = vmatpush1.msra.mxu0 %v1853
    %1855 = vmatprep.subr.mxu0 0.0
    %v1856 = vand.u32 %v1542, 4294901760
    %v1857 = vsub.f32 %v1542, %v1856
    %1858 = vmatpush1.msra.mxu0 %v1857
    %1859 = vmatprep.subr.mxu0 0.0
    %v1860 = vand.u32 %v1541, 4294901760
    %v1861 = vsub.f32 %v1541, %v1860
    %1862 = vmatpush1.msra.mxu0 %v1861
    %1863 = vmatprep.subr.mxu0 0.0
    %1864 = vmatpush2.msra.mxu0 0.0
    %1865 = vmatprep.subr.mxu0 0.0
    %1866 = vmatpush2.msra.mxu0 0.0
    %1867 = vmatprep.subr.mxu0 0.0
    %1868 = vmatpush2.msra.mxu0 0.0
    %1869 = vmatprep.subr.mxu0 0.0
    %1870 = vmatpush2.msra.mxu0 0.0
    %1871 = vmatprep.subr.mxu0 0.0
    %1872 = vmatpush2.msra.mxu0 0.0
    %1873 = vmatprep.subr.mxu0 0.0
    %1874 = vmatpush2.msra.mxu0 0.0
    %1875 = vmatprep.subr.mxu0 0.0
    %1876 = vmatpush2.msra.mxu0 0.0
    %1877 = vmatprep.subr.mxu0 0.0
    %1878 = vmatpush2.msra.mxu0 0.0
    %1879 = vmatprep.subr.mxu0 0.0
    %1880 = vmatpush2.msra.mxu0 0.0
    %1881 = vmatprep.subr.mxu0 0.0
    %1882 = vmatpush2.msra.mxu0 0.0
    %1883 = vmatprep.subr.mxu0 0.0
    %1884 = vmatpush2.msra.mxu0 0.0
    %1885 = vmatprep.subr.mxu0 0.0
    %1886 = vmatpush2.msra.mxu0 0.0
    %1887 = vmatprep.subr.mxu0 0.0
    %1888 = vmatpush2.msra.mxu0 0.0
    %1889 = vmatprep.subr.mxu0 0.0
    %1890 = vmatpush2.msra.mxu0 0.0
    %1891 = vmatprep.subr.mxu0 0.0
    %1892 = vmatpush2.msra.mxu0 0.0
    %1893 = vmatprep.subr.mxu0 0.0
    %1894 = vmatpush2.msra.mxu0 0.0
    %1895 = vmatprep.mubr.f32.mxu0 0.0
    %v1896 = vand.u32 %v1540, 4294901760
    %v1897 = vsub.f32 %v1540, %v1896
    %1898 = vmatmul.mubr.f32.gmra.mxu0 %v1897
    %v1899 = vpop.f32.mrf.mxu0
    %v1900 = vadd.f32 %v1796, %v1899
    %v1901 = vpop.f32.mrf.mxu0
    %1902 = vdwg.mxu0
    %1903 = vmatprep.subr.mxu0 0.0
    %v1904 = vand.u32 %v1556, 4294901760
    %1905 = vmatpush1.msra.mxu0 %v1904
    %1906 = vmatprep.subr.mxu0 0.0
    %v1907 = vand.u32 %v1555, 4294901760
    %1908 = vmatpush1.msra.mxu0 %v1907
    %1909 = vmatprep.subr.mxu0 0.0
    %v1910 = vand.u32 %v1554, 4294901760
    %1911 = vmatpush1.msra.mxu0 %v1910
    %1912 = vmatprep.subr.mxu0 0.0
    %v1913 = vand.u32 %v1553, 4294901760
    %1914 = vmatpush1.msra.mxu0 %v1913
    %1915 = vmatprep.subr.mxu0 0.0
    %v1916 = vand.u32 %v1552, 4294901760
    %1917 = vmatpush1.msra.mxu0 %v1916
    %1918 = vmatprep.subr.mxu0 0.0
    %v1919 = vand.u32 %v1551, 4294901760
    %1920 = vmatpush1.msra.mxu0 %v1919
    %1921 = vmatprep.subr.mxu0 0.0
    %v1922 = vand.u32 %v1550, 4294901760
    %1923 = vmatpush1.msra.mxu0 %v1922
    %1924 = vmatprep.subr.mxu0 0.0
    %v1925 = vand.u32 %v1549, 4294901760
    %1926 = vmatpush1.msra.mxu0 %v1925
    %1927 = vmatprep.subr.mxu0 0.0
    %v1928 = vand.u32 %v1548, 4294901760
    %1929 = vmatpush1.msra.mxu0 %v1928
    %1930 = vmatprep.subr.mxu0 0.0
    %v1931 = vand.u32 %v1547, 4294901760
    %1932 = vmatpush1.msra.mxu0 %v1931
    %1933 = vmatprep.subr.mxu0 0.0
    %v1934 = vand.u32 %v1546, 4294901760
    %1935 = vmatpush1.msra.mxu0 %v1934
    %1936 = vmatprep.subr.mxu0 0.0
    %v1937 = vand.u32 %v1545, 4294901760
    %1938 = vmatpush1.msra.mxu0 %v1937
    %1939 = vmatprep.subr.mxu0 0.0
    %v1940 = vand.u32 %v1544, 4294901760
    %1941 = vmatpush1.msra.mxu0 %v1940
    %1942 = vmatprep.subr.mxu0 0.0
    %v1943 = vand.u32 %v1543, 4294901760
    %1944 = vmatpush1.msra.mxu0 %v1943
    %1945 = vmatprep.subr.mxu0 0.0
    %v1946 = vand.u32 %v1542, 4294901760
    %1947 = vmatpush1.msra.mxu0 %v1946
    %1948 = vmatprep.subr.mxu0 0.0
    %v1949 = vand.u32 %v1541, 4294901760
    %1950 = vmatpush1.msra.mxu0 %v1949
    %1951 = vmatprep.subr.mxu0 0.0
    %1952 = vmatpush2.msra.mxu0 0.0
    %1953 = vmatprep.subr.mxu0 0.0
    %1954 = vmatpush2.msra.mxu0 0.0
    %1955 = vmatprep.subr.mxu0 0.0
    %1956 = vmatpush2.msra.mxu0 0.0
    %1957 = vmatprep.subr.mxu0 0.0
    %1958 = vmatpush2.msra.mxu0 0.0
    %1959 = vmatprep.subr.mxu0 0.0
    %1960 = vmatpush2.msra.mxu0 0.0
    %1961 = vmatprep.subr.mxu0 0.0
    %1962 = vmatpush2.msra.mxu0 0.0
    %1963 = vmatprep.subr.mxu0 0.0
    %1964 = vmatpush2.msra.mxu0 0.0
    %1965 = vmatprep.subr.mxu0 0.0
    %1966 = vmatpush2.msra.mxu0 0.0
    %1967 = vmatprep.subr.mxu0 0.0
    %1968 = vmatpush2.msra.mxu0 0.0
    %1969 = vmatprep.subr.mxu0 0.0
    %1970 = vmatpush2.msra.mxu0 0.0
    %1971 = vmatprep.subr.mxu0 0.0
    %1972 = vmatpush2.msra.mxu0 0.0
    %1973 = vmatprep.subr.mxu0 0.0
    %1974 = vmatpush2.msra.mxu0 0.0
    %1975 = vmatprep.subr.mxu0 0.0
    %1976 = vmatpush2.msra.mxu0 0.0
    %1977 = vmatprep.subr.mxu0 0.0
    %1978 = vmatpush2.msra.mxu0 0.0
    %1979 = vmatprep.subr.mxu0 0.0
    %1980 = vmatpush2.msra.mxu0 0.0
    %1981 = vmatprep.subr.mxu0 0.0
    %1982 = vmatpush2.msra.mxu0 0.0
    %1983 = vmatprep.mubr.f32.mxu0 0.0
    %v1984 = vand.u32 %v1540, 4294901760
    %v1985 = vsub.f32 %v1540, %v1984
    %v1986 = vand.u32 %v1985, 4294901760
    %1987 = vmatmul.mubr.f32.gmra.mxu0 %v1986
    %v1988 = vpop.f32.mrf.mxu0
    %v1989 = vadd.f32 %v1900, %v1988
    %v1990 = vpop.f32.mrf.mxu0
    %1991 = vdwg.mxu0
    %1992 = vmatprep.subr.mxu0 0.0
    %v1993 = vand.u32 %v1556, 4294901760
    %v1994 = vsub.f32 %v1556, %v1993
    %v1995 = vand.u32 %v1994, 4294901760
    %1996 = vmatpush1.msra.mxu0 %v1995
    %1997 = vmatprep.subr.mxu0 0.0
    %v1998 = vand.u32 %v1555, 4294901760
    %v1999 = vsub.f32 %v1555, %v1998
    %v2000 = vand.u32 %v1999, 4294901760
    %2001 = vmatpush1.msra.mxu0 %v2000
    %2002 = vmatprep.subr.mxu0 0.0
    %v2003 = vand.u32 %v1554, 4294901760
    %v2004 = vsub.f32 %v1554, %v2003
    %v2005 = vand.u32 %v2004, 4294901760
    %2006 = vmatpush1.msra.mxu0 %v2005
    %2007 = vmatprep.subr.mxu0 0.0
    %v2008 = vand.u32 %v1553, 4294901760
    %v2009 = vsub.f32 %v1553, %v2008
    %v2010 = vand.u32 %v2009, 4294901760
    %2011 = vmatpush1.msra.mxu0 %v2010
    %2012 = vmatprep.subr.mxu0 0.0
    %v2013 = vand.u32 %v1552, 4294901760
    %v2014 = vsub.f32 %v1552, %v2013
    %v2015 = vand.u32 %v2014, 4294901760
    %2016 = vmatpush1.msra.mxu0 %v2015
    %2017 = vmatprep.subr.mxu0 0.0
    %v2018 = vand.u32 %v1551, 4294901760
    %v2019 = vsub.f32 %v1551, %v2018
    %v2020 = vand.u32 %v2019, 4294901760
    %2021 = vmatpush1.msra.mxu0 %v2020
    %2022 = vmatprep.subr.mxu0 0.0
    %v2023 = vand.u32 %v1550, 4294901760
    %v2024 = vsub.f32 %v1550, %v2023
    %v2025 = vand.u32 %v2024, 4294901760
    %2026 = vmatpush1.msra.mxu0 %v2025
    %2027 = vmatprep.subr.mxu0 0.0
    %v2028 = vand.u32 %v1549, 4294901760
    %v2029 = vsub.f32 %v1549, %v2028
    %v2030 = vand.u32 %v2029, 4294901760
    %2031 = vmatpush1.msra.mxu0 %v2030
    %2032 = vmatprep.subr.mxu0 0.0
    %v2033 = vand.u32 %v1548, 4294901760
    %v2034 = vsub.f32 %v1548, %v2033
    %v2035 = vand.u32 %v2034, 4294901760
    %2036 = vmatpush1.msra.mxu0 %v2035
    %2037 = vmatprep.subr.mxu0 0.0
    %v2038 = vand.u32 %v1547, 4294901760
    %v2039 = vsub.f32 %v1547, %v2038
    %v2040 = vand.u32 %v2039, 4294901760
    %2041 = vmatpush1.msra.mxu0 %v2040
    %2042 = vmatprep.subr.mxu0 0.0
    %v2043 = vand.u32 %v1546, 4294901760
    %v2044 = vsub.f32 %v1546, %v2043
    %v2045 = vand.u32 %v2044, 4294901760
    %2046 = vmatpush1.msra.mxu0 %v2045
    %2047 = vmatprep.subr.mxu0 0.0
    %v2048 = vand.u32 %v1545, 4294901760
    %v2049 = vsub.f32 %v1545, %v2048
    %v2050 = vand.u32 %v2049, 4294901760
    %2051 = vmatpush1.msra.mxu0 %v2050
    %2052 = vmatprep.subr.mxu0 0.0
    %v2053 = vand.u32 %v1544, 4294901760
    %v2054 = vsub.f32 %v1544, %v2053
    %v2055 = vand.u32 %v2054, 4294901760
    %2056 = vmatpush1.msra.mxu0 %v2055
    %2057 = vmatprep.subr.mxu0 0.0
    %v2058 = vand.u32 %v1543, 4294901760
    %v2059 = vsub.f32 %v1543, %v2058
    %v2060 = vand.u32 %v2059, 4294901760
    %2061 = vmatpush1.msra.mxu0 %v2060
    %2062 = vmatprep.subr.mxu0 0.0
    %v2063 = vand.u32 %v1542, 4294901760
    %v2064 = vsub.f32 %v1542, %v2063
    %v2065 = vand.u32 %v2064, 4294901760
    %2066 = vmatpush1.msra.mxu0 %v2065
    %2067 = vmatprep.subr.mxu0 0.0
    %v2068 = vand.u32 %v1541, 4294901760
    %v2069 = vsub.f32 %v1541, %v2068
    %v2070 = vand.u32 %v2069, 4294901760
    %2071 = vmatpush1.msra.mxu0 %v2070
    %2072 = vmatprep.subr.mxu0 0.0
    %2073 = vmatpush2.msra.mxu0 0.0
    %2074 = vmatprep.subr.mxu0 0.0
    %2075 = vmatpush2.msra.mxu0 0.0
    %2076 = vmatprep.subr.mxu0 0.0
    %2077 = vmatpush2.msra.mxu0 0.0
    %2078 = vmatprep.subr.mxu0 0.0
    %2079 = vmatpush2.msra.mxu0 0.0
    %2080 = vmatprep.subr.mxu0 0.0
    %2081 = vmatpush2.msra.mxu0 0.0
    %2082 = vmatprep.subr.mxu0 0.0
    %2083 = vmatpush2.msra.mxu0 0.0
    %2084 = vmatprep.subr.mxu0 0.0
    %2085 = vmatpush2.msra.mxu0 0.0
    %2086 = vmatprep.subr.mxu0 0.0
    %2087 = vmatpush2.msra.mxu0 0.0
    %2088 = vmatprep.subr.mxu0 0.0
    %2089 = vmatpush2.msra.mxu0 0.0
    %2090 = vmatprep.subr.mxu0 0.0
    %2091 = vmatpush2.msra.mxu0 0.0
    %2092 = vmatprep.subr.mxu0 0.0
    %2093 = vmatpush2.msra.mxu0 0.0
    %2094 = vmatprep.subr.mxu0 0.0
    %2095 = vmatpush2.msra.mxu0 0.0
    %2096 = vmatprep.subr.mxu0 0.0
    %2097 = vmatpush2.msra.mxu0 0.0
    %2098 = vmatprep.subr.mxu0 0.0
    %2099 = vmatpush2.msra.mxu0 0.0
    %2100 = vmatprep.subr.mxu0 0.0
    %2101 = vmatpush2.msra.mxu0 0.0
    %2102 = vmatprep.subr.mxu0 0.0
    %2103 = vmatpush2.msra.mxu0 0.0
    %2104 = vmatprep.mubr.f32.mxu0 0.0
    %v2105 = vand.u32 %v1540, 4294901760
    %2106 = vmatmul.mubr.f32.gmra.mxu0 %v2105
    %v2107 = vpop.f32.mrf.mxu0
    %v2108 = vadd.f32 %v1989, %v2107
    %v2109 = vpop.f32.mrf.mxu0
    %2110 = vdwg.mxu0
    %2111 = vmatprep.subr.mxu0 0.0
    %v2112 = vand.u32 %v1556, 4294901760
    %2113 = vmatpush1.msra.mxu0 %v2112
    %2114 = vmatprep.subr.mxu0 0.0
    %v2115 = vand.u32 %v1555, 4294901760
    %2116 = vmatpush1.msra.mxu0 %v2115
    %2117 = vmatprep.subr.mxu0 0.0
    %v2118 = vand.u32 %v1554, 4294901760
    %2119 = vmatpush1.msra.mxu0 %v2118
    %2120 = vmatprep.subr.mxu0 0.0
    %v2121 = vand.u32 %v1553, 4294901760
    %2122 = vmatpush1.msra.mxu0 %v2121
    %2123 = vmatprep.subr.mxu0 0.0
    %v2124 = vand.u32 %v1552, 4294901760
    %2125 = vmatpush1.msra.mxu0 %v2124
    %2126 = vmatprep.subr.mxu0 0.0
    %v2127 = vand.u32 %v1551, 4294901760
    %2128 = vmatpush1.msra.mxu0 %v2127
    %2129 = vmatprep.subr.mxu0 0.0
    %v2130 = vand.u32 %v1550, 4294901760
    %2131 = vmatpush1.msra.mxu0 %v2130
    %2132 = vmatprep.subr.mxu0 0.0
    %v2133 = vand.u32 %v1549, 4294901760
    %2134 = vmatpush1.msra.mxu0 %v2133
    %2135 = vmatprep.subr.mxu0 0.0
    %v2136 = vand.u32 %v1548, 4294901760
    %2137 = vmatpush1.msra.mxu0 %v2136
    %2138 = vmatprep.subr.mxu0 0.0
    %v2139 = vand.u32 %v1547, 4294901760
    %2140 = vmatpush1.msra.mxu0 %v2139
    %2141 = vmatprep.subr.mxu0 0.0
    %v2142 = vand.u32 %v1546, 4294901760
    %2143 = vmatpush1.msra.mxu0 %v2142
    %2144 = vmatprep.subr.mxu0 0.0
    %v2145 = vand.u32 %v1545, 4294901760
    %2146 = vmatpush1.msra.mxu0 %v2145
    %2147 = vmatprep.subr.mxu0 0.0
    %v2148 = vand.u32 %v1544, 4294901760
    %2149 = vmatpush1.msra.mxu0 %v2148
    %2150 = vmatprep.subr.mxu0 0.0
    %v2151 = vand.u32 %v1543, 4294901760
    %2152 = vmatpush1.msra.mxu0 %v2151
    %2153 = vmatprep.subr.mxu0 0.0
    %v2154 = vand.u32 %v1542, 4294901760
    %2155 = vmatpush1.msra.mxu0 %v2154
    %2156 = vmatprep.subr.mxu0 0.0
    %v2157 = vand.u32 %v1541, 4294901760
    %2158 = vmatpush1.msra.mxu0 %v2157
    %2159 = vmatprep.subr.mxu0 0.0
    %2160 = vmatpush2.msra.mxu0 0.0
    %2161 = vmatprep.subr.mxu0 0.0
    %2162 = vmatpush2.msra.mxu0 0.0
    %2163 = vmatprep.subr.mxu0 0.0
    %2164 = vmatpush2.msra.mxu0 0.0
    %2165 = vmatprep.subr.mxu0 0.0
    %2166 = vmatpush2.msra.mxu0 0.0
    %2167 = vmatprep.subr.mxu0 0.0
    %2168 = vmatpush2.msra.mxu0 0.0
    %2169 = vmatprep.subr.mxu0 0.0
    %2170 = vmatpush2.msra.mxu0 0.0
    %2171 = vmatprep.subr.mxu0 0.0
    %2172 = vmatpush2.msra.mxu0 0.0
    %2173 = vmatprep.subr.mxu0 0.0
    %2174 = vmatpush2.msra.mxu0 0.0
    %2175 = vmatprep.subr.mxu0 0.0
    %2176 = vmatpush2.msra.mxu0 0.0
    %2177 = vmatprep.subr.mxu0 0.0
    %2178 = vmatpush2.msra.mxu0 0.0
    %2179 = vmatprep.subr.mxu0 0.0
    %2180 = vmatpush2.msra.mxu0 0.0
    %2181 = vmatprep.subr.mxu0 0.0
    %2182 = vmatpush2.msra.mxu0 0.0
    %2183 = vmatprep.subr.mxu0 0.0
    %2184 = vmatpush2.msra.mxu0 0.0
    %2185 = vmatprep.subr.mxu0 0.0
    %2186 = vmatpush2.msra.mxu0 0.0
    %2187 = vmatprep.subr.mxu0 0.0
    %2188 = vmatpush2.msra.mxu0 0.0
    %2189 = vmatprep.subr.mxu0 0.0
    %2190 = vmatpush2.msra.mxu0 0.0
    %2191 = vmatprep.mubr.f32.mxu0 0.0
    %v2192 = vand.u32 %v1540, 4294901760
    %2193 = vmatmul.mubr.f32.gmra.mxu0 %v2192
    %v2194 = vpop.f32.mrf.mxu0
    %v2195 = vadd.f32 %v2108, %v2194
    %v2196 = vpop.f32.mrf.mxu0
    %2197 = vdwg.mxu0
    %v2198 = vpack.c.bf16 %v807, %v807
    %v2199 = vpack.c.bf16 %v1501, %v1501
    %v2200 = vpack.c.bf16 %v2195, %v2195
    %v2201 = vld [vmem:[#allocation7] sm:$0xf]
    %v2202 = vld [vmem:[#allocation7 + $0x4] sm:$0xf]
    %v2203 = vld [vmem:[#allocation7 + $0x8] sm:$0xf]
    %v2204 = vld [vmem:[#allocation7 + $0xc] sm:$0xf]
    %v2205 = vld [vmem:[#allocation7 + $0x10] sm:$0xf]
    %v2206 = vld [vmem:[#allocation7 + $0x14] sm:$0xf]
    %v2207 = vld [vmem:[#allocation7 + $0x18] sm:$0xf]
    %v2208 = vld [vmem:[#allocation7 + $0x1c] sm:$0xf]
    %v2209 = vld [vmem:[#allocation7 + $0x20] sm:$0xf]
    %v2210 = vld [vmem:[#allocation7 + $0x24] sm:$0xf]
    %v2211 = vld [vmem:[#allocation7 + $0x28] sm:$0xf]
    %v2212 = vld [vmem:[#allocation7 + $0x2c] sm:$0xf]
    %v2213 = vld [vmem:[#allocation7 + $0x30] sm:$0xf]
    %v2214 = vld [vmem:[#allocation7 + $0x34] sm:$0xf]
    %v2215 = vld [vmem:[#allocation7 + $0x38] sm:$0xf]
    %v2216 = vld [vmem:[#allocation7 + $0x3c] sm:$0xf]
    %v2217 = vld [vmem:[#allocation7 + $0x40] sm:$0xf]
    %v2218 = vld [vmem:[#allocation7 + $0x44] sm:$0xf]
    %v2219 = vld [vmem:[#allocation7 + $0x48] sm:$0xf]
    %v2220 = vld [vmem:[#allocation7 + $0x4c] sm:$0xf]
    %v2221 = vld [vmem:[#allocation7 + $0x50] sm:$0xf]
    %v2222 = vld [vmem:[#allocation7 + $0x54] sm:$0xf]
    %v2223 = vld [vmem:[#allocation7 + $0x58] sm:$0xf]
    %v2224 = vld [vmem:[#allocation7 + $0x5c] sm:$0xf]
    %v2225 = vld [vmem:[#allocation7 + $0x60] sm:$0xf]
    %v2226 = vld [vmem:[#allocation7 + $0x64] sm:$0xf]
    %v2227 = vld [vmem:[#allocation7 + $0x68] sm:$0xf]
    %v2228 = vld [vmem:[#allocation7 + $0x6c] sm:$0xf]
    %v2229 = vld [vmem:[#allocation7 + $0x70] sm:$0xf]
    %v2230 = vld [vmem:[#allocation7 + $0x74] sm:$0xf]
    %v2231 = vld [vmem:[#allocation7 + $0x78] sm:$0xf]
    %v2232 = vld [vmem:[#allocation7 + $0x7c] sm:$0xf]
    %v2233 = vld [vmem:[#allocation7 + $0x80] sm:$0xf]
    %v2234 = vld [vmem:[#allocation7 + $0x84] sm:$0xf]
    %v2235 = vld [vmem:[#allocation7 + $0x88] sm:$0xf]
    %v2236 = vld [vmem:[#allocation7 + $0x8c] sm:$0xf]
    %v2237 = vld [vmem:[#allocation7 + $0x90] sm:$0xf]
    %v2238 = vld [vmem:[#allocation7 + $0x94] sm:$0xf]
    %v2239 = vld [vmem:[#allocation7 + $0x98] sm:$0xf]
    %v2240 = vld [vmem:[#allocation7 + $0x9c] sm:$0xf]
    %v2241 = vld [vmem:[#allocation7 + $0xa0] sm:$0xf]
    %v2242 = vld [vmem:[#allocation7 + $0xa4] sm:$0xf]
    %v2243 = vld [vmem:[#allocation7 + $0xa8] sm:$0xf]
    %v2244 = vld [vmem:[#allocation7 + $0xac] sm:$0xf]
    %v2245 = vld [vmem:[#allocation7 + $0xb0] sm:$0xf]
    %v2246 = vld [vmem:[#allocation7 + $0xb4] sm:$0xf]
    %v2247 = vld [vmem:[#allocation7 + $0xb8] sm:$0xf]
    %v2248 = vld [vmem:[#allocation7 + $0xbc] sm:$0xf]
    %v2249 = vld [vmem:[#allocation9] sm:$0x1]
    %v2251 = vlaneseq
    %v2252 = vshrl.u32 %v2251, 7
    %v2253 = vsub.s32 0, %v2252
    %v2254 = vrot.slane %v2249, %v2253
    %v2304 = vunpack.c.l.b16 %v2201
    %v2305 = vunpack.c.l.b16 %v2202
    %v2306 = vunpack.c.l.b16 %v2203
    %v2307 = vunpack.c.l.b16 %v2204
    %v2308 = vunpack.c.l.b16 %v2205
    %v2309 = vunpack.c.l.b16 %v2206
    %v2310 = vunpack.c.l.b16 %v2207
    %v2311 = vunpack.c.l.b16 %v2208
    %v2312 = vunpack.c.l.b16 %v2209
    %v2313 = vunpack.c.l.b16 %v2210
    %v2314 = vunpack.c.l.b16 %v2211
    %v2315 = vunpack.c.l.b16 %v2212
    %v2316 = vunpack.c.l.b16 %v2213
    %v2317 = vunpack.c.l.b16 %v2214
    %v2318 = vunpack.c.l.b16 %v2215
    %v2319 = vunpack.c.l.b16 %v2216
    %v2320 = vunpack.c.l.b16 %v2217
    %v2321 = vunpack.c.l.b16 %v2218
    %v2322 = vunpack.c.l.b16 %v2219
    %v2323 = vunpack.c.l.b16 %v2220
    %v2324 = vunpack.c.l.b16 %v2221
    %v2325 = vunpack.c.l.b16 %v2222
    %v2326 = vunpack.c.l.b16 %v2223
    %v2327 = vunpack.c.l.b16 %v2224
    %v2328 = vunpack.c.l.b16 %v2225
    %v2329 = vunpack.c.l.b16 %v2226
    %v2330 = vunpack.c.l.b16 %v2227
    %v2331 = vunpack.c.l.b16 %v2228
    %v2332 = vunpack.c.l.b16 %v2229
    %v2333 = vunpack.c.l.b16 %v2230
    %v2334 = vunpack.c.l.b16 %v2231
    %v2335 = vunpack.c.l.b16 %v2232
    %v2336 = vunpack.c.l.b16 %v2233
    %v2337 = vunpack.c.l.b16 %v2234
    %v2338 = vunpack.c.l.b16 %v2235
    %v2339 = vunpack.c.l.b16 %v2236
    %v2340 = vunpack.c.l.b16 %v2237
    %v2341 = vunpack.c.l.b16 %v2238
    %v2342 = vunpack.c.l.b16 %v2239
    %v2343 = vunpack.c.l.b16 %v2240
    %v2344 = vunpack.c.l.b16 %v2241
    %v2345 = vunpack.c.l.b16 %v2242
    %v2346 = vunpack.c.l.b16 %v2243
    %v2347 = vunpack.c.l.b16 %v2244
    %v2348 = vunpack.c.l.b16 %v2245
    %v2349 = vunpack.c.l.b16 %v2246
    %v2350 = vunpack.c.l.b16 %v2247
    %v2351 = vunpack.c.l.b16 %v2248
    %v2352 = vpack.c.b16 %v2305, %v2304
    %v2353 = vpack.c.b16 %v2307, %v2306
    %v2354 = vpack.c.b16 %v2309, %v2308
    %v2355 = vpack.c.b16 %v2311, %v2310
    %v2356 = vpack.c.b16 %v2313, %v2312
    %v2357 = vpack.c.b16 %v2315, %v2314
    %v2358 = vpack.c.b16 %v2317, %v2316
    %v2359 = vpack.c.b16 %v2319, %v2318
    %v2360 = vpack.c.b16 %v2321, %v2320
    %v2361 = vpack.c.b16 %v2323, %v2322
    %v2362 = vpack.c.b16 %v2325, %v2324
    %v2363 = vpack.c.b16 %v2327, %v2326
    %v2364 = vpack.c.b16 %v2329, %v2328
    %v2365 = vpack.c.b16 %v2331, %v2330
    %v2366 = vpack.c.b16 %v2333, %v2332
    %v2367 = vpack.c.b16 %v2335, %v2334
    %v2368 = vpack.c.b16 %v2337, %v2336
    %v2369 = vpack.c.b16 %v2339, %v2338
    %v2370 = vpack.c.b16 %v2341, %v2340
    %v2371 = vpack.c.b16 %v2343, %v2342
    %v2372 = vpack.c.b16 %v2345, %v2344
    %v2373 = vpack.c.b16 %v2347, %v2346
    %v2374 = vpack.c.b16 %v2349, %v2348
    %v2375 = vpack.c.b16 %v2351, %v2350
    %2400 = vmatprep.subr.bf16.mxu0 0
    %2401 = vmatpush1.bf16.msra.mxu0 %v2359
    %2402 = vmatprep.subr.bf16.mxu0 0
    %2403 = vmatpush1.bf16.msra.mxu0 %v2358
    %2404 = vmatprep.subr.bf16.mxu0 0
    %2405 = vmatpush1.bf16.msra.mxu0 %v2357
    %2406 = vmatprep.subr.bf16.mxu0 0
    %2407 = vmatpush1.bf16.msra.mxu0 %v2356
    %2408 = vmatprep.subr.bf16.mxu0 0
    %2409 = vmatpush1.bf16.msra.mxu0 %v2355
    %2410 = vmatprep.subr.bf16.mxu0 0
    %2411 = vmatpush1.bf16.msra.mxu0 %v2354
    %2412 = vmatprep.subr.bf16.mxu0 0
    %2413 = vmatpush1.bf16.msra.mxu0 %v2353
    %2414 = vmatprep.subr.bf16.mxu0 0
    %2415 = vmatpush1.bf16.msra.mxu0 %v2352
    %2416 = vmatprep.subr.bf16.mxu0 0
    %2417 = vmatpush2.bf16.msra.mxu0 %v2367
    %2418 = vmatprep.subr.bf16.mxu0 0
    %2419 = vmatpush2.bf16.msra.mxu0 %v2366
    %2420 = vmatprep.subr.bf16.mxu0 0
    %2421 = vmatpush2.bf16.msra.mxu0 %v2365
    %2422 = vmatprep.subr.bf16.mxu0 0
    %2423 = vmatpush2.bf16.msra.mxu0 %v2364
    %2424 = vmatprep.subr.bf16.mxu0 0
    %2425 = vmatpush2.bf16.msra.mxu0 %v2363
    %2426 = vmatprep.subr.bf16.mxu0 0
    %2427 = vmatpush2.bf16.msra.mxu0 %v2362
    %2428 = vmatprep.subr.bf16.mxu0 0
    %2429 = vmatpush2.bf16.msra.mxu0 %v2361
    %2430 = vmatprep.subr.bf16.mxu0 0
    %2431 = vmatpush2.bf16.msra.mxu0 %v2360
    %2432 = vmatprep.mubr.bf16.mxu0 %v2199
    %2433 = vmatmul.mubr.bf16.gmra.mxu0 %v2198
    %v2434 = vpop.f32.mrf.mxu0
    %v2435 = vadd.f32 %v2254, %v2434
    %v2436 = vpop.f32.mrf.mxu0
    %v2437 = vpop.f32.mrf.mxu0
    %v2438 = vpop.f32.mrf.mxu0
    %2439 = vdwg.mxu0
    %2440 = vmatprep.subr.bf16.mxu0 0
    %2441 = vmatpush1.bf16.msra.mxu0 %v2375
    %2442 = vmatprep.subr.bf16.mxu0 0
    %2443 = vmatpush1.bf16.msra.mxu0 %v2374
    %2444 = vmatprep.subr.bf16.mxu0 0
    %2445 = vmatpush1.bf16.msra.mxu0 %v2373
    %2446 = vmatprep.subr.bf16.mxu0 0
    %2447 = vmatpush1.bf16.msra.mxu0 %v2372
    %2448 = vmatprep.subr.bf16.mxu0 0
    %2449 = vmatpush1.bf16.msra.mxu0 %v2371
    %2450 = vmatprep.subr.bf16.mxu0 0
    %2451 = vmatpush1.bf16.msra.mxu0 %v2370
    %2452 = vmatprep.subr.bf16.mxu0 0
    %2453 = vmatpush1.bf16.msra.mxu0 %v2369
    %2454 = vmatprep.subr.bf16.mxu0 0
    %2455 = vmatpush1.bf16.msra.mxu0 %v2368
    %2456 = vmatprep.subr.bf16.mxu0 0
    %2457 = vmatpush2.bf16.msra.mxu0 0
    %2458 = vmatprep.subr.bf16.mxu0 0
    %2459 = vmatpush2.bf16.msra.mxu0 0
    %2460 = vmatprep.subr.bf16.mxu0 0
    %2461 = vmatpush2.bf16.msra.mxu0 0
    %2462 = vmatprep.subr.bf16.mxu0 0
    %2463 = vmatpush2.bf16.msra.mxu0 0
    %2464 = vmatprep.subr.bf16.mxu0 0
    %2465 = vmatpush2.bf16.msra.mxu0 0
    %2466 = vmatprep.subr.bf16.mxu0 0
    %2467 = vmatpush2.bf16.msra.mxu0 0
    %2468 = vmatprep.subr.bf16.mxu0 0
    %2469 = vmatpush2.bf16.msra.mxu0 0
    %2470 = vmatprep.subr.bf16.mxu0 0
    %2471 = vmatpush2.bf16.msra.mxu0 0
    %2472 = vmatprep.mubr.bf16.mxu0 0
    %2473 = vmatmul.mubr.bf16.gmra.mxu0 %v2200
    %v2474 = vpop.f32.mrf.mxu0
    %v2475 = vadd.f32 %v2435, %v2474
    %v2476 = vpop.f32.mrf.mxu0
    %v2477 = vpop.f32.mrf.mxu0
    %v2478 = vpop.f32.mrf.mxu0
    %2479 = vdwg.mxu0
    %v2480 = vmax.f32 %v2475, 0.0
    %v2481 = vpack.c.bf16 %v2480, %v2480
    %v2482 = vld [vmem:[%s8] sm:$0xf]
    %v2483 = vld [vmem:[%s8 + $0x4] sm:$0xf]
    %v2484 = vld [vmem:[%s8 + $0x8] sm:$0xf]
    %v2485 = vld [vmem:[%s8 + $0xc] sm:$0xf]
    %v2486 = vld [vmem:[%s8 + $0x10] sm:$0xf]
    %v2487 = vld [vmem:[%s8 + $0x14] sm:$0xf]
    %v2488 = vld [vmem:[%s8 + $0x18] sm:$0xf]
    %v2489 = vld [vmem:[%s8 + $0x1c] sm:$0xf]
    %v2490 = vld [vmem:[%s8 + $0x20] sm:$0xf]
    %v2491 = vld [vmem:[%s8 + $0x24] sm:$0xf]
    %v2492 = vld [vmem:[%s8 + $0x28] sm:$0xf]
    %v2493 = vld [vmem:[%s8 + $0x2c] sm:$0xf]
    %v2494 = vld [vmem:[%s8 + $0x30] sm:$0xf]
    %v2495 = vld [vmem:[%s8 + $0x34] sm:$0xf]
    %v2496 = vld [vmem:[%s8 + $0x38] sm:$0xf]
    %v2497 = vld [vmem:[%s8 + $0x3c] sm:$0xf]
    %v2498 = vld [vmem:[#allocation10] sm:$0x1]
    %v2500 = vlaneseq
    %v2501 = vshrl.u32 %v2500, 7
    %v2502 = vsub.s32 0, %v2501
    %v2503 = vrot.slane %v2498, %v2502
    %v2521 = vunpack.c.l.b16 %v2482
    %v2522 = vunpack.c.l.b16 %v2483
    %v2523 = vunpack.c.l.b16 %v2484
    %v2524 = vunpack.c.l.b16 %v2485
    %v2525 = vunpack.c.l.b16 %v2486
    %v2526 = vunpack.c.l.b16 %v2487
    %v2527 = vunpack.c.l.b16 %v2488
    %v2528 = vunpack.c.l.b16 %v2489
    %v2529 = vunpack.c.l.b16 %v2490
    %v2530 = vunpack.c.l.b16 %v2491
    %v2531 = vunpack.c.l.b16 %v2492
    %v2532 = vunpack.c.l.b16 %v2493
    %v2533 = vunpack.c.l.b16 %v2494
    %v2534 = vunpack.c.l.b16 %v2495
    %v2535 = vunpack.c.l.b16 %v2496
    %v2536 = vunpack.c.l.b16 %v2497
    %v2537 = vpack.c.b16 %v2522, %v2521
    %v2538 = vpack.c.b16 %v2524, %v2523
    %v2539 = vpack.c.b16 %v2526, %v2525
    %v2540 = vpack.c.b16 %v2528, %v2527
    %v2541 = vpack.c.b16 %v2530, %v2529
    %v2542 = vpack.c.b16 %v2532, %v2531
    %v2543 = vpack.c.b16 %v2534, %v2533
    %v2544 = vpack.c.b16 %v2536, %v2535
    %2553 = vmatprep.subr.bf16.mxu0 0
    %2554 = vmatpush1.bf16.msra.mxu0 %v2544
    %2555 = vmatprep.subr.bf16.mxu0 0
    %2556 = vmatpush1.bf16.msra.mxu0 %v2543
    %2557 = vmatprep.subr.bf16.mxu0 0
    %2558 = vmatpush1.bf16.msra.mxu0 %v2542
    %2559 = vmatprep.subr.bf16.mxu0 0
    %2560 = vmatpush1.bf16.msra.mxu0 %v2541
    %2561 = vmatprep.subr.bf16.mxu0 0
    %2562 = vmatpush1.bf16.msra.mxu0 %v2540
    %2563 = vmatprep.subr.bf16.mxu0 0
    %2564 = vmatpush1.bf16.msra.mxu0 %v2539
    %2565 = vmatprep.subr.bf16.mxu0 0
    %2566 = vmatpush1.bf16.msra.mxu0 %v2538
    %2567 = vmatprep.subr.bf16.mxu0 0
    %2568 = vmatpush1.bf16.msra.mxu0 %v2537
    %2569 = vmatprep.subr.bf16.mxu0 0
    %2570 = vmatpush2.bf16.msra.mxu0 0
    %2571 = vmatprep.subr.bf16.mxu0 0
    %2572 = vmatpush2.bf16.msra.mxu0 0
    %2573 = vmatprep.subr.bf16.mxu0 0
    %2574 = vmatpush2.bf16.msra.mxu0 0
    %2575 = vmatprep.subr.bf16.mxu0 0
    %2576 = vmatpush2.bf16.msra.mxu0 0
    %2577 = vmatprep.subr.bf16.mxu0 0
    %2578 = vmatpush2.bf16.msra.mxu0 0
    %2579 = vmatprep.subr.bf16.mxu0 0
    %2580 = vmatpush2.bf16.msra.mxu0 0
    %2581 = vmatprep.subr.bf16.mxu0 0
    %2582 = vmatpush2.bf16.msra.mxu0 0
    %2583 = vmatprep.subr.bf16.mxu0 0
    %2584 = vmatpush2.bf16.msra.mxu0 0
    %2585 = vmatprep.mubr.bf16.mxu0 0
    %2586 = vmatmul.mubr.bf16.gmra.mxu0 %v2481
    %v2587 = vpop.f32.mrf.mxu0
    %v2588 = vadd.f32 %v2503, %v2587
    %v2589 = vpop.f32.mrf.mxu0
    %v2590 = vpop.f32.mrf.mxu0
    %v2591 = vpop.f32.mrf.mxu0
    %2592 = vdwg.mxu0
    %v2593 = vxor.u32 %v2588, 2147483648
    %v2594 = vmul.f32 %v2593, 1.442695
    %v2595 = vpow.pop %v2594
    %v2596 = vadd.f32 %v2595, 1.0
    %v2597 = vrcp.pop %v2596
    %v2598 = vmul.f32 1.0, %v2597
    %2599 = vst [vmem:[%s10] sm:$0xff] %v2598
    // Predicated region
    $region66: #{prescription_forward.1} parent=1 // pred_check
      _
    $region67: #{prescription_forward.1} parent=1 // pred_check_branch
      %2601 = sbr.rel (0) target = $region69
    $region68: #{prescription_forward.1} parent=1 // pred_region
      _
    $region69: #{prescription_forward.1} parent=1 // pred_fallthru
      _
    // Predicated region
    $region70: #{prescription_forward.1} parent=1 // pred_check
      _
    $region71: #{prescription_forward.1} parent=1 // pred_check_branch
      %2603 = sbr.rel (0) target = $region73
    $region72: #{prescription_forward.1} parent=1 // pred_region
      _
    $region73: #{prescription_forward.1} parent=1 // pred_fallthru
      _
    %2604 = vsyncpa [#allocation3], 1
    %2605 = vsyncpa [#allocation5], 1
    %2606 = vsyncpa [#allocation8], 1
    %2607 = vsyncpa [#allocation11], 1

</llo_original>
